<compile_context>
chip_gen: v7x
topology: tpu7x:2x2x1
jax: 0.10.0
libtpu: 0.0.40
codegen_flags: <defaults>
</compile_context>

<pallas_src>
import functools

import jax
import jax.numpy as jnp
from jax import lax
from jax.experimental import pallas as pl
from jax.experimental.pallas import tpu as pltpu


# ------------------------------- Pallas kernel ------------------------------ #

def _bisenet_output_kernel(x_ref, w3_ref, b_ref, wo_ref, out_ref, *, tile_h, width):
    """Fused ConvBNReLU(3x3, pad=1) + Conv1x1 for one (batch, H-tile).

    x_ref  : (3, tile_h, width+2, Cin)   bf16  3 row-shifted views of the
             zero-padded input: row h of view dh == padded row (h + dh).
    w3_ref : (9, Cin, Cmid)              bf16  conv weight, BN scale folded,
             tap order kh*3 + kw.
    b_ref  : (1, Cmid)                   f32   folded BN bias.
    wo_ref : (Cmid, n_classes)           bf16  1x1 conv_out weight.
    out_ref: (tile_h, width, n_classes)  f32
    """
    cin = x_ref.shape[-1]
    cmid = w3_ref.shape[-1]
    ncls = wo_ref.shape[-1]

    acc = jnp.zeros((tile_h * width, cmid), jnp.float32)
    for dh in range(3):                              # static unroll: 9 MXU matmuls
        xs = x_ref[dh]                               # (tile_h, width+2, Cin) bf16
        for dw in range(3):
            slab = xs[:, dw:dw + width, :].reshape(tile_h * width, cin)
            acc = acc + jnp.dot(slab, w3_ref[dh * 3 + dw],
                                preferred_element_type=jnp.float32)

    mid = jnp.maximum(acc + b_ref[...], 0.0)                     # folded BN + ReLU (f32)
    out = jnp.dot(mid.astype(jnp.bfloat16), wo_ref[...],
                  preferred_element_type=jnp.float32)            # 1x1 conv_out
    out_ref[...] = out.reshape(tile_h, width, ncls).astype(out_ref.dtype)


# ------------------------------- wrapper ------------------------------------ #

def _pick_tile_h(h):
    # 8 sublane-aligned output rows per tile -> 8*W matmul rows (512-1024 at
    # real BiSeNet resolutions).  Many small "parallel" steps => DMA overlap
    # and even 2-TC sharding on v7x.  Fall back to full H if it does not divide.
    return 8 if h % 8 == 0 else h


@jax.jit
def bisenet_output(x_nchw, prep):
    """BiSeNetOutput forward: (N, Cin, H, W) f32 -> (N, n_classes, H, W) f32."""
    n, cin, h, w = x_nchw.shape
    w3, bias, wout = prep["w3"], prep["bias"], prep["w_out"]
    cmid = w3.shape[-1]
    ncls = wout.shape[-1]

    x = jnp.transpose(x_nchw, (0, 2, 3, 1)).astype(jnp.bfloat16)     # NHWC, bf16
    xp = jnp.pad(x, ((0, 0), (1, 1), (1, 1), (0, 0)))                # zero pad = 1
    # 3 row-shifted views (the kh taps); kw taps are static slices in the kernel.
    x3 = jnp.stack([xp[:, d:d + h] for d in range(3)], axis=1)       # (N,3,H,W+2,Cin)

    tile_h = _pick_tile_h(h)
    grid = (n, h // tile_h)

    kernel = functools.partial(_bisenet_output_kernel, tile_h=tile_h, width=w)
    out_nhwc = pl.pallas_call(
        kernel,
        out_shape=jax.ShapeDtypeStruct((n, h, w, ncls), jnp.float32),
        grid=grid,
        in_specs=[
            pl.BlockSpec((None, 3, tile_h, w + 2, cin), lambda b, i: (b, 0, i, 0, 0)),
            pl.BlockSpec((9, cin, cmid), lambda b, i: (0, 0, 0)),
            pl.BlockSpec((1, cmid), lambda b, i: (0, 0)),
            pl.BlockSpec((cmid, ncls), lambda b, i: (0, 0)),
        ],
        # TODO(synk): n_classes < 128 leaves the output lane dim masked on
        # stores; acceptable for logits-sized last dims.
        out_specs=pl.BlockSpec((None, tile_h, w, ncls), lambda b, i: (b, i, 0, 0)),
        compiler_params=pltpu.CompilerParams(
            dimension_semantics=("parallel", "parallel"),
            vmem_limit_bytes=64 * 1024 * 1024),
    )(x3, w3, bias, wout)

    return jnp.transpose(out_nhwc, (0, 3, 1, 2))                     # back to NCHW


# ------------------------------- params & reference ------------------------- #

def make_params(key, cin, cmid, ncls, eps=1e-5):
    k1, k2, kg, kb, km, kv = jax.random.split(key, 6)
    # nn.init.kaiming_normal_(w, a=1): gain = sqrt(2/(1+1)) = 1, std = 1/sqrt(fan_in)
    w_conv = jax.random.normal(k1, (cmid, cin, 3, 3), jnp.float32) * (1.0 / (cin * 9)) ** 0.5
    w_out = jax.random.normal(k2, (ncls, cmid, 1, 1), jnp.float32) * (1.0 / cmid) ** 0.5
    gamma = 1.0 + 0.1 * jax.random.normal(kg, (cmid,), jnp.float32)
    beta = 0.1 * jax.random.normal(kb, (cmid,), jnp.float32)
    mean = 0.05 * jax.random.normal(km, (cmid,), jnp.float32)
    var = 1.0 + 0.1 * jax.random.uniform(kv, (cmid,), jnp.float32)
    raw = dict(w_conv=w_conv, w_out=w_out, gamma=gamma, beta=beta,
               mean=mean, var=var, eps=eps)

    # Fold BN (eval mode) into the conv weights, reorder to (kh*3+kw, Cin, Cmid),
    # cast matmul operands to bf16; keep the bias in f32 for the VPU epilogue.
    scale = gamma / jnp.sqrt(var + eps)                        # (Cmid,)
    bias = beta - mean * scale                                 # (Cmid,)
    w_folded = w_conv * scale[:, None, None, None]             # (Cmid, Cin, 3, 3)
    w3 = jnp.transpose(w_folded, (2, 3, 1, 0)).reshape(9, cin, cmid)
    prep = dict(w3=w3.astype(jnp.bfloat16),
                bias=bias.reshape(1, cmid).astype(jnp.float32),
                w_out=jnp.transpose(w_out[:, :, 0, 0]).astype(jnp.bfloat16))
    return raw, prep


def reference_forward(x_nchw, raw):
    """Plain-JAX f32 reference of the PyTorch BiSeNetOutput forward (eval BN)."""
    dn = ("NCHW", "OIHW", "NCHW")
    y = lax.conv_general_dilated(x_nchw, raw["w_conv"], (1, 1),
                                 ((1, 1), (1, 1)), dimension_numbers=dn)
    scale = raw["gamma"] / jnp.sqrt(raw["var"] + raw["eps"])
    shift = raw["beta"] - raw["mean"] * scale
    y = jnp.maximum(y * scale.reshape(1, -1, 1, 1) + shift.reshape(1, -1, 1, 1), 0.0)
    return lax.conv_general_dilated(y, raw["w_out"], (1, 1),
                                    ((0, 0), (0, 0)), dimension_numbers=dn)


# ------------------------------- main ---------------------------------------- #

if __name__ == "__main__":
    key = jax.random.PRNGKey(0)
    kx, kp = jax.random.split(key)

    N, CIN, H, W = 2, 32, 16, 16      # small test shapes (NCHW, like PyTorch)
    CMID, NCLS = 64, 16               # mid_chan, n_classes

    x = jax.random.normal(kx, (N, CIN, H, W), jnp.float32)
    raw, prep = make_params(kp, CIN, CMID, NCLS)

    out = bisenet_output(x, prep)
    out = jax.block_until_ready(out)

    assert out.shape == (N, NCLS, H, W)
    assert bool(jnp.all(jnp.isfinite(out)))

    ref = reference_forward(x, raw)
    # bf16 matmuls (f32 accumulate) vs pure-f32 reference: loose but bug-catching.
    assert bool(jnp.allclose(out, ref, atol=1e-1, rtol=1e-1)), (
        "max abs err = %f" % float(jnp.max(jnp.abs(out - ref))))

    print("KERNEL_OK")
</pallas_src>

<mosaic_0001>
module attributes {stable_mosaic.version = 11 : i64} {
  func.func @_bisenet_output_kernel(%arg0: i32, %arg1: i32, %arg2: memref<1x3x8x18x32xbf16, #tpu.memory_space<vmem>>, %arg3: memref<9x32x64xbf16, #tpu.memory_space<vmem>>, %arg4: memref<1x64xf32, #tpu.memory_space<vmem>>, %arg5: memref<64x16xbf16, #tpu.memory_space<vmem>>, %arg6: memref<1x8x16x16xf32, #tpu.memory_space<vmem>>) attributes {dimension_semantics = [#tpu.dimension_semantics<parallel>, #tpu.dimension_semantics<parallel>], iteration_bounds = array<i64: 2, 2>, scalar_prefetch = 0 : i64, scratch_operands = 0 : i64, tpu.core_type = #tpu.core_type<tc>, window_params = [{transform_indices = @transform_0, window_bounds = array<i64: 1, 3, 8, 18, 32>}, {pipeline_mode = #tpu.pipeline_mode<synchronous>, transform_indices = @transform_1, window_bounds = array<i64: 9, 32, 64>}, {pipeline_mode = #tpu.pipeline_mode<synchronous>, transform_indices = @transform_2, window_bounds = array<i64: 1, 64>}, {pipeline_mode = #tpu.pipeline_mode<synchronous>, transform_indices = @transform_3, window_bounds = array<i64: 64, 16>}, {transform_indices = @transform_4, window_bounds = array<i64: 1, 8, 16, 16>}]} {
    %cst = arith.constant 0.000000e+00 : f32
    %0 = vector.broadcast %cst : f32 to vector<128x64xf32>
    %c0 = arith.constant 0 : index
    %c0_0 = arith.constant 0 : index
    %c0_1 = arith.constant 0 : index
    %c0_2 = arith.constant 0 : index
    %c0_3 = arith.constant 0 : index
    %1 = vector.load %arg2[%c0, %c0_0, %c0_1, %c0_2, %c0_3] : memref<1x3x8x18x32xbf16, #tpu.memory_space<vmem>>, vector<1x1x8x18x32xbf16>
    %2 = vector.shape_cast %1 : vector<1x1x8x18x32xbf16> to vector<8x18x32xbf16>
    %3 = vector.extract_strided_slice %2 {offsets = [0, 0, 0], sizes = [8, 16, 32], strides = [1, 1, 1]} : vector<8x18x32xbf16> to vector<8x16x32xbf16>
    %4 = vector.shape_cast %3 : vector<8x16x32xbf16> to vector<128x32xbf16>
    %c0_4 = arith.constant 0 : index
    %c0_5 = arith.constant 0 : index
    %c0_6 = arith.constant 0 : index
    %5 = vector.load %arg3[%c0_4, %c0_5, %c0_6] : memref<9x32x64xbf16, #tpu.memory_space<vmem>>, vector<1x32x64xbf16>
    %6 = vector.shape_cast %5 : vector<1x32x64xbf16> to vector<32x64xbf16>
    %cst_7 = arith.constant dense<0.000000e+00> : vector<128x64xf32>
    %7 = tpu.matmul %4, %6, %cst_7 {dimension_numbers = #tpu.dot_dimension_numbers<[1], [0], [0], [1], [0, 0, 1, 1], [], []>} : vector<128x32xbf16>, vector<32x64xbf16>, vector<128x64xf32> -> vector<128x64xf32>
    %8 = arith.addf %0, %7 : vector<128x64xf32>
    %9 = vector.extract_strided_slice %2 {offsets = [0, 1, 0], sizes = [8, 16, 32], strides = [1, 1, 1]} : vector<8x18x32xbf16> to vector<8x16x32xbf16>
    %10 = vector.shape_cast %9 : vector<8x16x32xbf16> to vector<128x32xbf16>
    %c1 = arith.constant 1 : index
    %c0_8 = arith.constant 0 : index
    %c0_9 = arith.constant 0 : index
    %11 = vector.load %arg3[%c1, %c0_8, %c0_9] : memref<9x32x64xbf16, #tpu.memory_space<vmem>>, vector<1x32x64xbf16>
    %12 = vector.shape_cast %11 : vector<1x32x64xbf16> to vector<32x64xbf16>
    %cst_10 = arith.constant dense<0.000000e+00> : vector<128x64xf32>
    %13 = tpu.matmul %10, %12, %cst_10 {dimension_numbers = #tpu.dot_dimension_numbers<[1], [0], [0], [1], [0, 0, 1, 1], [], []>} : vector<128x32xbf16>, vector<32x64xbf16>, vector<128x64xf32> -> vector<128x64xf32>
    %14 = arith.addf %8, %13 : vector<128x64xf32>
    %15 = vector.extract_strided_slice %2 {offsets = [0, 2, 0], sizes = [8, 16, 32], strides = [1, 1, 1]} : vector<8x18x32xbf16> to vector<8x16x32xbf16>
    %16 = vector.shape_cast %15 : vector<8x16x32xbf16> to vector<128x32xbf16>
    %c2 = arith.constant 2 : index
    %c0_11 = arith.constant 0 : index
    %c0_12 = arith.constant 0 : index
    %17 = vector.load %arg3[%c2, %c0_11, %c0_12] : memref<9x32x64xbf16, #tpu.memory_space<vmem>>, vector<1x32x64xbf16>
    %18 = vector.shape_cast %17 : vector<1x32x64xbf16> to vector<32x64xbf16>
    %cst_13 = arith.constant dense<0.000000e+00> : vector<128x64xf32>
    %19 = tpu.matmul %16, %18, %cst_13 {dimension_numbers = #tpu.dot_dimension_numbers<[1], [0], [0], [1], [0, 0, 1, 1], [], []>} : vector<128x32xbf16>, vector<32x64xbf16>, vector<128x64xf32> -> vector<128x64xf32>
    %20 = arith.addf %14, %19 : vector<128x64xf32>
    %c0_14 = arith.constant 0 : index
    %c1_15 = arith.constant 1 : index
    %c0_16 = arith.constant 0 : index
    %c0_17 = arith.constant 0 : index
    %c0_18 = arith.constant 0 : index
    %21 = vector.load %arg2[%c0_14, %c1_15, %c0_16, %c0_17, %c0_18] : memref<1x3x8x18x32xbf16, #tpu.memory_space<vmem>>, vector<1x1x8x18x32xbf16>
    %22 = vector.shape_cast %21 : vector<1x1x8x18x32xbf16> to vector<8x18x32xbf16>
    %23 = vector.extract_strided_slice %22 {offsets = [0, 0, 0], sizes = [8, 16, 32], strides = [1, 1, 1]} : vector<8x18x32xbf16> to vector<8x16x32xbf16>
    %24 = vector.shape_cast %23 : vector<8x16x32xbf16> to vector<128x32xbf16>
    %c3 = arith.constant 3 : index
    %c0_19 = arith.constant 0 : index
    %c0_20 = arith.constant 0 : index
    %25 = vector.load %arg3[%c3, %c0_19, %c0_20] : memref<9x32x64xbf16, #tpu.memory_space<vmem>>, vector<1x32x64xbf16>
    %26 = vector.shape_cast %25 : vector<1x32x64xbf16> to vector<32x64xbf16>
    %cst_21 = arith.constant dense<0.000000e+00> : vector<128x64xf32>
    %27 = tpu.matmul %24, %26, %cst_21 {dimension_numbers = #tpu.dot_dimension_numbers<[1], [0], [0], [1], [0, 0, 1, 1], [], []>} : vector<128x32xbf16>, vector<32x64xbf16>, vector<128x64xf32> -> vector<128x64xf32>
    %28 = arith.addf %20, %27 : vector<128x64xf32>
    %29 = vector.extract_strided_slice %22 {offsets = [0, 1, 0], sizes = [8, 16, 32], strides = [1, 1, 1]} : vector<8x18x32xbf16> to vector<8x16x32xbf16>
    %30 = vector.shape_cast %29 : vector<8x16x32xbf16> to vector<128x32xbf16>
    %c4 = arith.constant 4 : index
    %c0_22 = arith.constant 0 : index
    %c0_23 = arith.constant 0 : index
    %31 = vector.load %arg3[%c4, %c0_22, %c0_23] : memref<9x32x64xbf16, #tpu.memory_space<vmem>>, vector<1x32x64xbf16>
    %32 = vector.shape_cast %31 : vector<1x32x64xbf16> to vector<32x64xbf16>
    %cst_24 = arith.constant dense<0.000000e+00> : vector<128x64xf32>
    %33 = tpu.matmul %30, %32, %cst_24 {dimension_numbers = #tpu.dot_dimension_numbers<[1], [0], [0], [1], [0, 0, 1, 1], [], []>} : vector<128x32xbf16>, vector<32x64xbf16>, vector<128x64xf32> -> vector<128x64xf32>
    %34 = arith.addf %28, %33 : vector<128x64xf32>
    %35 = vector.extract_strided_slice %22 {offsets = [0, 2, 0], sizes = [8, 16, 32], strides = [1, 1, 1]} : vector<8x18x32xbf16> to vector<8x16x32xbf16>
    %36 = vector.shape_cast %35 : vector<8x16x32xbf16> to vector<128x32xbf16>
    %c5 = arith.constant 5 : index
    %c0_25 = arith.constant 0 : index
    %c0_26 = arith.constant 0 : index
    %37 = vector.load %arg3[%c5, %c0_25, %c0_26] : memref<9x32x64xbf16, #tpu.memory_space<vmem>>, vector<1x32x64xbf16>
    %38 = vector.shape_cast %37 : vector<1x32x64xbf16> to vector<32x64xbf16>
    %cst_27 = arith.constant dense<0.000000e+00> : vector<128x64xf32>
    %39 = tpu.matmul %36, %38, %cst_27 {dimension_numbers = #tpu.dot_dimension_numbers<[1], [0], [0], [1], [0, 0, 1, 1], [], []>} : vector<128x32xbf16>, vector<32x64xbf16>, vector<128x64xf32> -> vector<128x64xf32>
    %40 = arith.addf %34, %39 : vector<128x64xf32>
    %c0_28 = arith.constant 0 : index
    %c2_29 = arith.constant 2 : index
    %c0_30 = arith.constant 0 : index
    %c0_31 = arith.constant 0 : index
    %c0_32 = arith.constant 0 : index
    %41 = vector.load %arg2[%c0_28, %c2_29, %c0_30, %c0_31, %c0_32] : memref<1x3x8x18x32xbf16, #tpu.memory_space<vmem>>, vector<1x1x8x18x32xbf16>
    %42 = vector.shape_cast %41 : vector<1x1x8x18x32xbf16> to vector<8x18x32xbf16>
    %43 = vector.extract_strided_slice %42 {offsets = [0, 0, 0], sizes = [8, 16, 32], strides = [1, 1, 1]} : vector<8x18x32xbf16> to vector<8x16x32xbf16>
    %44 = vector.shape_cast %43 : vector<8x16x32xbf16> to vector<128x32xbf16>
    %c6 = arith.constant 6 : index
    %c0_33 = arith.constant 0 : index
    %c0_34 = arith.constant 0 : index
    %45 = vector.load %arg3[%c6, %c0_33, %c0_34] : memref<9x32x64xbf16, #tpu.memory_space<vmem>>, vector<1x32x64xbf16>
    %46 = vector.shape_cast %45 : vector<1x32x64xbf16> to vector<32x64xbf16>
    %cst_35 = arith.constant dense<0.000000e+00> : vector<128x64xf32>
    %47 = tpu.matmul %44, %46, %cst_35 {dimension_numbers = #tpu.dot_dimension_numbers<[1], [0], [0], [1], [0, 0, 1, 1], [], []>} : vector<128x32xbf16>, vector<32x64xbf16>, vector<128x64xf32> -> vector<128x64xf32>
    %48 = arith.addf %40, %47 : vector<128x64xf32>
    %49 = vector.extract_strided_slice %42 {offsets = [0, 1, 0], sizes = [8, 16, 32], strides = [1, 1, 1]} : vector<8x18x32xbf16> to vector<8x16x32xbf16>
    %50 = vector.shape_cast %49 : vector<8x16x32xbf16> to vector<128x32xbf16>
    %c7 = arith.constant 7 : index
    %c0_36 = arith.constant 0 : index
    %c0_37 = arith.constant 0 : index
    %51 = vector.load %arg3[%c7, %c0_36, %c0_37] : memref<9x32x64xbf16, #tpu.memory_space<vmem>>, vector<1x32x64xbf16>
    %52 = vector.shape_cast %51 : vector<1x32x64xbf16> to vector<32x64xbf16>
    %cst_38 = arith.constant dense<0.000000e+00> : vector<128x64xf32>
    %53 = tpu.matmul %50, %52, %cst_38 {dimension_numbers = #tpu.dot_dimension_numbers<[1], [0], [0], [1], [0, 0, 1, 1], [], []>} : vector<128x32xbf16>, vector<32x64xbf16>, vector<128x64xf32> -> vector<128x64xf32>
    %54 = arith.addf %48, %53 : vector<128x64xf32>
    %55 = vector.extract_strided_slice %42 {offsets = [0, 2, 0], sizes = [8, 16, 32], strides = [1, 1, 1]} : vector<8x18x32xbf16> to vector<8x16x32xbf16>
    %56 = vector.shape_cast %55 : vector<8x16x32xbf16> to vector<128x32xbf16>
    %c8 = arith.constant 8 : index
    %c0_39 = arith.constant 0 : index
    %c0_40 = arith.constant 0 : index
    %57 = vector.load %arg3[%c8, %c0_39, %c0_40] : memref<9x32x64xbf16, #tpu.memory_space<vmem>>, vector<1x32x64xbf16>
    %58 = vector.shape_cast %57 : vector<1x32x64xbf16> to vector<32x64xbf16>
    %cst_41 = arith.constant dense<0.000000e+00> : vector<128x64xf32>
    %59 = tpu.matmul %56, %58, %cst_41 {dimension_numbers = #tpu.dot_dimension_numbers<[1], [0], [0], [1], [0, 0, 1, 1], [], []>} : vector<128x32xbf16>, vector<32x64xbf16>, vector<128x64xf32> -> vector<128x64xf32>
    %60 = arith.addf %54, %59 : vector<128x64xf32>
    %c0_42 = arith.constant 0 : index
    %c0_43 = arith.constant 0 : index
    %61 = vector.load %arg4[%c0_42, %c0_43] : memref<1x64xf32, #tpu.memory_space<vmem>>, vector<1x64xf32>
    %62 = vector.broadcast %61 : vector<1x64xf32> to vector<128x64xf32>
    %63 = arith.addf %60, %62 : vector<128x64xf32>
    %cst_44 = arith.constant 0.000000e+00 : f32
    %64 = vector.broadcast %cst_44 : f32 to vector<128x64xf32>
    %65 = arith.maximumf %63, %64 : vector<128x64xf32>
    %66 = arith.truncf %65 : vector<128x64xf32> to vector<128x64xbf16>
    %c0_45 = arith.constant 0 : index
    %c0_46 = arith.constant 0 : index
    %67 = vector.load %arg5[%c0_45, %c0_46] : memref<64x16xbf16, #tpu.memory_space<vmem>>, vector<64x16xbf16>
    %cst_47 = arith.constant dense<0.000000e+00> : vector<128x16xf32>
    %68 = tpu.matmul %66, %67, %cst_47 {dimension_numbers = #tpu.dot_dimension_numbers<[1], [0], [0], [1], [0, 0, 1, 1], [], []>} : vector<128x64xbf16>, vector<64x16xbf16>, vector<128x16xf32> -> vector<128x16xf32>
    %69 = vector.shape_cast %68 : vector<128x16xf32> to vector<8x16x16xf32>
    %c0_48 = arith.constant 0 : index
    %c0_49 = arith.constant 0 : index
    %c0_50 = arith.constant 0 : index
    %c0_51 = arith.constant 0 : index
    %70 = vector.load %arg6[%c0_48, %c0_49, %c0_50, %c0_51] : memref<1x8x16x16xf32, #tpu.memory_space<vmem>>, vector<1x8x16x16xf32>
    %71 = vector.shape_cast %70 : vector<1x8x16x16xf32> to vector<8x16x16xf32>
    %72 = vector.shape_cast %69 : vector<8x16x16xf32> to vector<1x8x16x16xf32>
    tpu.vector_store %arg6[%c0_48, %c0_49, %c0_50, %c0_51], %72 {strides = array<i32>} : memref<1x8x16x16xf32, #tpu.memory_space<vmem>>, vector<1x8x16x16xf32>,
    return
  }
  func.func @transform_0(%arg0: i32, %arg1: i32) -> (i32, i32, i32, i32, i32) {
    %c0_i32 = arith.constant 0 : i32
    %c0_i32_0 = arith.constant 0 : i32
    %c0_i32_1 = arith.constant 0 : i32
    %c0_i32_2 = arith.constant 0 : i32
    return %arg0, %c0_i32, %arg1, %c0_i32_0, %c0_i32_1 : i32, i32, i32, i32, i32
  }
  func.func @transform_1(%arg0: i32, %arg1: i32) -> (i32, i32, i32) {
    %c0_i32 = arith.constant 0 : i32
    %c0_i32_0 = arith.constant 0 : i32
    %c0_i32_1 = arith.constant 0 : i32
    %c0_i32_2 = arith.constant 0 : i32
    return %c0_i32, %c0_i32_0, %c0_i32_1 : i32, i32, i32
  }
  func.func @transform_2(%arg0: i32, %arg1: i32) -> (i32, i32) {
    %c0_i32 = arith.constant 0 : i32
    %c0_i32_0 = arith.constant 0 : i32
    %c0_i32_1 = arith.constant 0 : i32
    return %c0_i32, %c0_i32_0 : i32, i32
  }
  func.func @transform_3(%arg0: i32, %arg1: i32) -> (i32, i32) {
    %c0_i32 = arith.constant 0 : i32
    %c0_i32_0 = arith.constant 0 : i32
    %c0_i32_1 = arith.constant 0 : i32
    return %c0_i32, %c0_i32_0 : i32, i32
  }
  func.func @transform_4(%arg0: i32, %arg1: i32) -> (i32, i32, i32, i32) {
    %c0_i32 = arith.constant 0 : i32
    %c0_i32_0 = arith.constant 0 : i32
    %c0_i32_1 = arith.constant 0 : i32
    return %arg0, %arg1, %c0_i32, %c0_i32_0 : i32, i32, i32, i32
  }
}

</mosaic_0001>

<llo_original>
// kernel: bisenet_output.1
$region0: #{bisenet_output.1}
  #allocation0 [shape = 'u32[]', space=smem, size = 0x4, offset = 0x4, fixed_abs, tag = 'smem constant byte address 0x4 - core index']
  #allocation1 [shape = 'u32[144,128]{1,0:T(1,128)}', space=vmem, size = 0x12000, scoped, tag = 'internal scratch']
  #allocation11 [shape = 's32[]', space=sflag, size = 0x4, offset = 0, fixed_abs, tag = 'sflag constant byte address 0x0 - dummy sync flag']
  %s0 = inlined_call_operand.hbm [shape: bf16[2,3,16,18,32], index: 0, kind: input, shape index: {}]
  %s1 = inlined_call_operand.hbm [shape: bf16[9,32,64], index: 1, kind: input, shape index: {}]
  %s2 = inlined_call_operand.hbm [shape: f32[1,64], index: 2, kind: input, shape index: {}]
  %s3 = inlined_call_operand.hbm [shape: bf16[64,16], index: 3, kind: input, shape index: {}]
  %s4 = inlined_call_operand.hbm [shape: f32[2,16,16,16], index: 4, kind: output, shape index: {}]
  %s5 = sld [smem:[#allocation0]]
  $region65: #{bisenet_output.1} parent=0
    _
  %s7 = ssub.s32 1, %s5
  %s8 = scalar_select 0, %s7, %s5
  $region1: #{bisenet_output.1} parent=0
    #allocation2 [shape = 'u8[294912]{0}', space=vmem, size = 0x48000, scoped, tag = 'input window, operand 0']
    #allocation3 [shape = 's32[2]{0}', space=sflag, size = 0x8, scoped, tag = 'scoped memory for bisenet_output.1']
    #allocation4 [shape = 's32[2]{0}', space=sflag, size = 0x8, scoped, tag = 'scoped memory for bisenet_output.1']
    #allocation5 [shape = 'u8[73728]{0}', space=vmem, size = 0x12000, scoped, tag = 'input window, operand 1, single buffered']
    #allocation6 [shape = 's32[1]{0}', space=sflag, size = 0x4, scoped, tag = 'scoped memory for bisenet_output.1']
    #allocation7 [shape = 'u8[512]{0}', space=vmem, size = 0x400, scoped, tag = 'input window, operand 2, single buffered']
    #allocation8 [shape = 'u8[16384]{0}', space=vmem, size = 0x4000, scoped, tag = 'input window, operand 3, single buffered']
    #allocation9 [shape = 's32[1]{0}', space=sflag, size = 0x4, scoped, tag = 'scoped memory for bisenet_output.1']
    #allocation10 [shape = 'u8[131072]{0}', space=vmem, size = 0x20000, scoped, tag = 'output window, operand 0']
    %9 = vsyncpa [#allocation3], 0
    %s10 = scalar_lea.sflag [#allocation3], 1
    %11 = vsyncpa %s10, 0
    %12 = vsyncpa [#allocation6], 0
    %13 = vsyncpa [#allocation9], 0
    %14 = vsyncpa [#allocation4], 0
    %s15 = scalar_lea.sflag [#allocation4], 1
    %16 = vsyncpa %s15, 0
    loop: start=0, step=1, limit=6
    $region2: #{bisenet_output.1} parent=1 // loop_pre_header
      _
    $region3: #{bisenet_output.1} parent=1 // loop_header
      %s18 = sphi 0, %s22
      %p19 = scmp.ge.s32.totalorder %s18, 6
      %s25 = sphi 0, %s37
      %s26 = sphi 0, %s33
      %s27 = sphi 0, %s25
      %s28 = sphi 0, %s26
      %s29 = sphi 0, %s27
      %s30 = sphi 0, %s28
      %s42 = sphi 0, %s44
      %s45 = sphi 0, %s42
      %s46 = sphi 0, %s45
      %s62 = sphi 0, %s46
      %s66 = sphi 0, %s66
      %s68 = sphi 0, %s66
      %s69 = sphi 0, %s68
      %s83 = sphi 0, %s69
      %s87 = sphi 0, %s87
      %s89 = sphi 0, %s87
      %s90 = sphi 0, %s89
      %s104 = sphi 0, %s90
      %s108 = sphi 0, %s108
      %s110 = sphi 0, %s108
      %s111 = sphi 0, %s110
      %s125 = sphi 0, %s111
      %s133 = sphi 0, %s135
      %s136 = sphi 0, %s133
      %s137 = sphi 0, %s136
      %s153 = sphi 0, %s137
    $region4: #{bisenet_output.1} parent=1 // loop_header_branch
      %21 = sbr.rel (%p19) target = $region8
    $region5: #{bisenet_output.1} parent=1 // loop_body
      %s23 = ssub.s32 %s18, 1
      %s24 = ssub.s32 %s18, 2
      %s31 = sadd.s32 1, %s26
      %p32 = scmp.ge.s32.totalorder %s31, 2
      %s33 = scalar_select %p32, 0, %s31
      %s34 = sadd.s32 1, %s25
      %s35 = scalar_select %p32, %s34, %s25
      %p36 = scmp.ge.s32.totalorder %s35, 2
      %s37 = scalar_select %p36, 0, %s35
      %s38 = ssub.s32 %s25, %s37
      %s39 = ssub.s32 %s26, %s33
      %s40 = sor.u32 %s38, %s39
      %p41 = scmp.eq.s32.totalorder %s40, 0
      %s43 = sadd.s32 %s42, 1
      %s44 = scalar_select %p41, %s42, %s43
      %p47 = pneg %p41
      %p48 = scmp.eq.s32.totalorder %s18, 3
      %p49 = por %p47, %p48
      %p50 = scmp.ne.s32.totalorder %s42, %s45
      %p51 = scmp.eq.s32.totalorder %s18, 0
      %p52 = por %p50, %p51
      %p53 = scmp.ne.s32.totalorder %s42, %s45
      %p54 = scmp.eq.s32.totalorder %s23, 3
      %p55 = por %p53, %p54
      %p56 = scmp.ne.s32.totalorder %s45, %s46
      %p57 = scmp.eq.s32.totalorder %s23, 0
      %p58 = por %p56, %p57
      %p59 = scmp.ne.s32.totalorder %s45, %s46
      %p60 = scmp.eq.s32.totalorder %s24, 3
      %p61 = por %p59, %p60
      %p63 = scmp.ne.s32.totalorder %s46, %s62
      %p64 = scmp.eq.s32.totalorder %s24, 0
      %p65 = por %p63, %p64
      %s67 = sadd.s32 %s66, 1
      %p70 = scmp.eq.s32.totalorder %s18, 3
      %p71 = scmp.ne.s32.totalorder %s66, %s68
      %p72 = scmp.eq.s32.totalorder %s18, 0
      %p73 = por %p71, %p72
      %p74 = scmp.ne.s32.totalorder %s66, %s68
      %p75 = scmp.eq.s32.totalorder %s23, 3
      %p76 = por %p74, %p75
      %p77 = scmp.ne.s32.totalorder %s68, %s69
      %p78 = scmp.eq.s32.totalorder %s23, 0
      %p79 = por %p77, %p78
      %p80 = scmp.ne.s32.totalorder %s68, %s69
      %p81 = scmp.eq.s32.totalorder %s24, 3
      %p82 = por %p80, %p81
      %p84 = scmp.ne.s32.totalorder %s69, %s83
      %p85 = scmp.eq.s32.totalorder %s24, 0
      %p86 = por %p84, %p85
      %s88 = sadd.s32 %s87, 1
      %p91 = scmp.eq.s32.totalorder %s18, 3
      %p92 = scmp.ne.s32.totalorder %s87, %s89
      %p93 = scmp.eq.s32.totalorder %s18, 0
      %p94 = por %p92, %p93
      %p95 = scmp.ne.s32.totalorder %s87, %s89
      %p96 = scmp.eq.s32.totalorder %s23, 3
      %p97 = por %p95, %p96
      %p98 = scmp.ne.s32.totalorder %s89, %s90
      %p99 = scmp.eq.s32.totalorder %s23, 0
      %p100 = por %p98, %p99
      %p101 = scmp.ne.s32.totalorder %s89, %s90
      %p102 = scmp.eq.s32.totalorder %s24, 3
      %p103 = por %p101, %p102
      %p105 = scmp.ne.s32.totalorder %s90, %s104
      %p106 = scmp.eq.s32.totalorder %s24, 0
      %p107 = por %p105, %p106
      %s109 = sadd.s32 %s108, 1
      %p112 = scmp.eq.s32.totalorder %s18, 3
      %p113 = scmp.ne.s32.totalorder %s108, %s110
      %p114 = scmp.eq.s32.totalorder %s18, 0
      %p115 = por %p113, %p114
      %p116 = scmp.ne.s32.totalorder %s108, %s110
      %p117 = scmp.eq.s32.totalorder %s23, 3
      %p118 = por %p116, %p117
      %p119 = scmp.ne.s32.totalorder %s110, %s111
      %p120 = scmp.eq.s32.totalorder %s23, 0
      %p121 = por %p119, %p120
      %p122 = scmp.ne.s32.totalorder %s110, %s111
      %p123 = scmp.eq.s32.totalorder %s24, 3
      %p124 = por %p122, %p123
      %p126 = scmp.ne.s32.totalorder %s111, %s125
      %p127 = scmp.eq.s32.totalorder %s24, 0
      %p128 = por %p126, %p127
      %s129 = ssub.s32 %s25, %s37
      %s130 = ssub.s32 %s26, %s33
      %s131 = sor.u32 %s129, %s130
      %p132 = scmp.eq.s32.totalorder %s131, 0
      %s134 = sadd.s32 %s133, 1
      %s135 = scalar_select %p132, %s133, %s134
      %p138 = pneg %p132
      %p139 = scmp.eq.s32.totalorder %s18, 3
      %p140 = por %p138, %p139
      %p141 = scmp.ne.s32.totalorder %s133, %s136
      %p142 = scmp.eq.s32.totalorder %s18, 0
      %p143 = por %p141, %p142
      %p144 = scmp.ne.s32.totalorder %s133, %s136
      %p145 = scmp.eq.s32.totalorder %s23, 3
      %p146 = por %p144, %p145
      %p147 = scmp.ne.s32.totalorder %s136, %s137
      %p148 = scmp.eq.s32.totalorder %s23, 0
      %p149 = por %p147, %p148
      %p150 = scmp.ne.s32.totalorder %s136, %s137
      %p151 = scmp.eq.s32.totalorder %s24, 3
      %p152 = por %p150, %p151
      %p154 = scmp.ne.s32.totalorder %s137, %s153
      %p155 = scmp.eq.s32.totalorder %s24, 0
      %p156 = por %p154, %p155
      %p157 = scmp.le.s32.totalorder 1, %s18
      %p158 = scmp.lt.s32.totalorder %s18, 5
      %p159 = pnand %p157, %p158
      %p160 = pneg %p159
      // Predicated region
      $region9: #{bisenet_output.1} parent=5 // pred_check
        _
      $region10: #{bisenet_output.1} parent=5 // pred_check_branch
        %162 = sbr.rel (%p159) target = $region12
      $region11: #{bisenet_output.1} parent=5 // pred_region
        %s163 = ssub.s32 %s18, 1
        // Predicated region
        $region13: #{bisenet_output.1} parent=11 // pred_check
          %p164 = pneg %p79
        $region14: #{bisenet_output.1} parent=11 // pred_check_branch
          %166 = sbr.rel (%p164) target = $region16
        $region15: #{bisenet_output.1} parent=11 // pred_region
          %s168 = ssub.s32 2304, 2304
          %169 = vsyncadd [#allocation6], %s168
          %s170 = sshll.u32 [#allocation5], 4
          %s171 = int_to_ptr.vmem [resolvable:$true] %s170
          %176 = dma.hbm_to_vmem [thread:$0]  %s1, 2304, %s171, [#allocation6], 64, 64, 4
        $region16: #{bisenet_output.1} parent=11 // pred_fallthru
          _
        // Predicated region
        $region17: #{bisenet_output.1} parent=11 // pred_check
          %p177 = pneg %p100
        $region18: #{bisenet_output.1} parent=11 // pred_check_branch
          %179 = sbr.rel (%p177) target = $region20
        $region19: #{bisenet_output.1} parent=11 // pred_region
          %s181 = ssub.s32 16, 16
          %182 = vsyncadd [#allocation6], %s181
          %s184 = sshll.u32 [#allocation7], 4
          %s185 = int_to_ptr.vmem [resolvable:$true] %s184
          %187 = dma.hbm_to_vmem [thread:$0]  %s2, 16, %s185, [#allocation6]
        $region20: #{bisenet_output.1} parent=11 // pred_fallthru
          _
        // Predicated region
        $region21: #{bisenet_output.1} parent=11 // pred_check
          %p188 = pneg %p121
        $region22: #{bisenet_output.1} parent=11 // pred_check_branch
          %190 = sbr.rel (%p188) target = $region24
        $region23: #{bisenet_output.1} parent=11 // pred_region
          %s192 = ssub.s32 512, 512
          %193 = vsyncadd [#allocation9], %s192
          %s194 = sshll.u32 [#allocation8], 4
          %s195 = int_to_ptr.vmem [resolvable:$true] %s194
          %200 = dma.hbm_to_vmem [thread:$0]  %s3, 512, %s195, [#allocation9], 64, 64, 4
        $region24: #{bisenet_output.1} parent=11 // pred_fallthru
          _
      $region12: #{bisenet_output.1} parent=5 // pred_fallthru
        _
      %p201 = scmp.lt.s32.totalorder %s18, 4
      // Predicated region
      $region25: #{bisenet_output.1} parent=5 // pred_check
        %p202 = pneg %p201
      $region26: #{bisenet_output.1} parent=5 // pred_check_branch
        %204 = sbr.rel (%p202) target = $region28
      $region27: #{bisenet_output.1} parent=5 // pred_region
        // Predicated region
        $region29: #{bisenet_output.1} parent=27 // pred_check
          %p205 = pneg %p52
        $region30: #{bisenet_output.1} parent=27 // pred_check_branch
          %207 = sbr.rel (%p205) target = $region32
        $region31: #{bisenet_output.1} parent=27 // pred_region
          #allocation12 [shape = 'u32[6]{0}', space=smem, size = 0x18, scoped, tag = 'DMA stride descriptor']
          %s208 = sand.u32 %s42, 1
          %s209 = scalar_lea.sflag [#allocation3], %s208
          %s210 = sand.u32 %s42, 1
          %s211 = smul.addr %s210, 288
          %s212 = scalar_lea.vmem [#allocation2], %s211
          %s213 = smul.u32 8, %s26
          %s215 = ssub.s32 4608, 4608
          %216 = vsyncadd %s209, %s215
          %s217 = smul.addr %s213, 3
          %s218 = smul.addr %s25, 144
          %s219 = sadd.s32 %s217, %s218
          %s220 = smul.addr %s219, 64
          %s221 = scalar_lea.hbm %s0, %s220
          %s223 = sshll.u32 1, 14
          %s224 = sxor.u32 4294967295, %s223
          %s226 = sld [smem:[#allocation0]]
          %s227 = sadd.s32 2, %s226
          %s229 = sshll.u32 7, 26
          %s230 = sxor.u32 4294967295, %s229
          %s231 = sand.u32 0, %s230
          %s232 = sshll.u32 %s227, 26
          %s233 = sor.u32 %s231, %s232
          %s234 = sshll.u32 %s212, 4
          %s235 = int_to_ptr.vmem [resolvable:$true] %s234
          %241 = sst [smem:[#allocation12]] 3072
          %s242 = scalar_lea.smem [#allocation12], 1
          %243 = sst [smem:[%s242]] 1536
          %s244 = scalar_lea.smem [#allocation12], 2
          %245 = sst [smem:[%s244]] 24
          %s246 = scalar_lea.smem [#allocation12], 3
          %247 = sst [smem:[%s246]] 64
          %s248 = scalar_lea.smem [#allocation12], 4
          %249 = sst [smem:[%s248]] 64
          %s250 = scalar_lea.smem [#allocation12], 5
          %251 = sst [smem:[%s250]] 4
          %253 = dma.general %s221, 4608, %s235, %s209, [#allocation11], [#allocation12], %s233, 0
        $region32: #{bisenet_output.1} parent=27 // pred_fallthru
          _
      $region28: #{bisenet_output.1} parent=5 // pred_fallthru
        _
      %p254 = scmp.le.s32.totalorder 1, %s18
      %p255 = scmp.lt.s32.totalorder %s18, 5
      %p256 = pnand %p254, %p255
      %p257 = pneg %p256
      // Predicated region
      $region33: #{bisenet_output.1} parent=5 // pred_check
        _
      $region34: #{bisenet_output.1} parent=5 // pred_check_branch
        %259 = sbr.rel (%p256) target = $region36
      $region35: #{bisenet_output.1} parent=5 // pred_region
        %s260 = ssub.s32 %s18, 1
        %s261 = sand.u32 %s45, 1
        %s262 = scalar_lea.sflag [#allocation3], %s261
        %s263 = sand.u32 %s45, 1
        %s264 = smul.addr %s263, 288
        %s265 = scalar_lea.vmem [#allocation2], %s264
        // Predicated region
        $region37: #{bisenet_output.1} parent=35 // pred_check
          %p266 = pneg %p58
        $region38: #{bisenet_output.1} parent=35 // pred_check_branch
          %268 = sbr.rel (%p266) target = $region40
        $region39: #{bisenet_output.1} parent=35 // pred_region
          %269 = dma.done %s262, 4608
        $region40: #{bisenet_output.1} parent=35 // pred_fallthru
          _
        // Predicated region
        $region41: #{bisenet_output.1} parent=35 // pred_check
          %p270 = pneg %p79
        $region42: #{bisenet_output.1} parent=35 // pred_check_branch
          %272 = sbr.rel (%p270) target = $region44
        $region43: #{bisenet_output.1} parent=35 // pred_region
          %273 = dma.done [#allocation6], 2304
        $region44: #{bisenet_output.1} parent=35 // pred_fallthru
          _
        // Predicated region
        $region45: #{bisenet_output.1} parent=35 // pred_check
          %p274 = pneg %p100
        $region46: #{bisenet_output.1} parent=35 // pred_check_branch
          %276 = sbr.rel (%p274) target = $region48
        $region47: #{bisenet_output.1} parent=35 // pred_region
          %277 = dma.done [#allocation6], 16
        $region48: #{bisenet_output.1} parent=35 // pred_fallthru
          _
        // Predicated region
        $region49: #{bisenet_output.1} parent=35 // pred_check
          %p278 = pneg %p121
        $region50: #{bisenet_output.1} parent=35 // pred_check_branch
          %280 = sbr.rel (%p278) target = $region52
        $region51: #{bisenet_output.1} parent=35 // pred_region
          %281 = dma.done [#allocation9], 512
        $region52: #{bisenet_output.1} parent=35 // pred_fallthru
          _
        %s282 = sand.u32 %s45, 1
        %s283 = scalar_lea.sflag [#allocation3], %s282
        %s284 = sand.u32 %s45, 1
        %s285 = smul.addr %s284, 288
        %s286 = scalar_lea.vmem [#allocation2], %s285
        %p287 = pneg %p58
        %p288 = pneg %p55
        %p289 = pneg %p79
        %p290 = pneg %p76
        %p291 = pneg %p100
        %p292 = pneg %p97
        %p293 = pneg %p121
        %p294 = pneg %p118
        %p295 = pneg %p149
        %p296 = pneg %p146
        %s297 = sand.u32 %s136, 1
        %s298 = scalar_lea.sflag [#allocation4], %s297
        %s299 = sand.u32 %s136, 1
        %s300 = smul.addr %s299, 128
        %s301 = scalar_lea.vmem [#allocation10], %s300
        %s302 = smul.u32 8, %s28
        %s303 = smul.u32 8, %s28
        %v305 = vld [vmem:[%s265] sm:$0xf]
        %v306 = vld [vmem:[%s265 + $0x4] sm:$0xf]
        %v307 = vld [vmem:[%s265 + $0x8] sm:$0x1]
        %v308 = vld [vmem:[%s265 + $0xc] sm:$0xf]
        %v309 = vld [vmem:[%s265 + $0x10] sm:$0xf]
        %v310 = vld [vmem:[%s265 + $0x14] sm:$0x1]
        %v311 = vld [vmem:[%s265 + $0x18] sm:$0xf]
        %v312 = vld [vmem:[%s265 + $0x1c] sm:$0xf]
        %v313 = vld [vmem:[%s265 + $0x20] sm:$0x1]
        %v314 = vld [vmem:[%s265 + $0x24] sm:$0xf]
        %v315 = vld [vmem:[%s265 + $0x28] sm:$0xf]
        %v316 = vld [vmem:[%s265 + $0x2c] sm:$0x1]
        %v317 = vld [vmem:[%s265 + $0x30] sm:$0xf]
        %v318 = vld [vmem:[%s265 + $0x34] sm:$0xf]
        %v319 = vld [vmem:[%s265 + $0x38] sm:$0x1]
        %v320 = vld [vmem:[%s265 + $0x3c] sm:$0xf]
        %v321 = vld [vmem:[%s265 + $0x40] sm:$0xf]
        %v322 = vld [vmem:[%s265 + $0x44] sm:$0x1]
        %v323 = vld [vmem:[%s265 + $0x48] sm:$0xf]
        %v324 = vld [vmem:[%s265 + $0x4c] sm:$0xf]
        %v325 = vld [vmem:[%s265 + $0x50] sm:$0x1]
        %v326 = vld [vmem:[%s265 + $0x54] sm:$0xf]
        %v327 = vld [vmem:[%s265 + $0x58] sm:$0xf]
        %v328 = vld [vmem:[%s265 + $0x5c] sm:$0x1]
        %v329 = vld [vmem:[#allocation5] sm:$0xf]
        %v330 = vld [vmem:[#allocation5 + $0x4] sm:$0xf]
        %v331 = vld [vmem:[#allocation5 + $0x8] sm:$0xf]
        %v332 = vld [vmem:[#allocation5 + $0xc] sm:$0xf]
        %vm333 = vsmask.f32 3328
        %vm334 = vsmask.f32 7440
        %vm335 = vmor %vm333, %vm334
        %v337 = vshrl.u32 %v305, 16
        %v339 = vrot.slane %v337, 4
        %v340 = vshll.u32 %v305, 16
        %v342 = vrot.slane %v340, 5
        %v343 = vor.u32 %v339, %v342
        %v344 = vrot.slane %v343, 4
        %v346 = vshll.u32 %v306, 16
        %v348 = vrot.slane %v346, 5
        %v349 = vsel %vm335, %v344, %v348
        %v350 = vshrl.u32 %v306, 16
        %v352 = vrot.slane %v350, 4
        %v353 = vor.u32 %v352, %v348
        %v354 = vrot.slane %v353, 4
        %v356 = vshll.u32 %v307, 16
        %v358 = vrot.slane %v356, 5
        %v359 = vsel %vm335, %v354, %v358
        %v361 = vshrl.u32 %v308, 16
        %v363 = vrot.slane %v361, 4
        %v364 = vshll.u32 %v308, 16
        %v366 = vrot.slane %v364, 5
        %v367 = vor.u32 %v363, %v366
        %v368 = vrot.slane %v367, 4
        %v370 = vshll.u32 %v309, 16
        %v372 = vrot.slane %v370, 5
        %v373 = vsel %vm335, %v368, %v372
        %v374 = vshrl.u32 %v309, 16
        %v376 = vrot.slane %v374, 4
        %v377 = vor.u32 %v376, %v372
        %v378 = vrot.slane %v377, 4
        %v380 = vshll.u32 %v310, 16
        %v382 = vrot.slane %v380, 5
        %v383 = vsel %vm335, %v378, %v382
        %v385 = vshrl.u32 %v311, 16
        %v387 = vrot.slane %v385, 4
        %v388 = vshll.u32 %v311, 16
        %v390 = vrot.slane %v388, 5
        %v391 = vor.u32 %v387, %v390
        %v392 = vrot.slane %v391, 4
        %v394 = vshll.u32 %v312, 16
        %v396 = vrot.slane %v394, 5
        %v397 = vsel %vm335, %v392, %v396
        %v398 = vshrl.u32 %v312, 16
        %v400 = vrot.slane %v398, 4
        %v401 = vor.u32 %v400, %v396
        %v402 = vrot.slane %v401, 4
        %v404 = vshll.u32 %v313, 16
        %v406 = vrot.slane %v404, 5
        %v407 = vsel %vm335, %v402, %v406
        %v409 = vshrl.u32 %v314, 16
        %v411 = vrot.slane %v409, 4
        %v412 = vshll.u32 %v314, 16
        %v414 = vrot.slane %v412, 5
        %v415 = vor.u32 %v411, %v414
        %v416 = vrot.slane %v415, 4
        %v418 = vshll.u32 %v315, 16
        %v420 = vrot.slane %v418, 5
        %v421 = vsel %vm335, %v416, %v420
        %v422 = vshrl.u32 %v315, 16
        %v424 = vrot.slane %v422, 4
        %v425 = vor.u32 %v424, %v420
        %v426 = vrot.slane %v425, 4
        %v428 = vshll.u32 %v316, 16
        %v430 = vrot.slane %v428, 5
        %v431 = vsel %vm335, %v426, %v430
        %v433 = vshrl.u32 %v317, 16
        %v435 = vrot.slane %v433, 4
        %v436 = vshll.u32 %v317, 16
        %v438 = vrot.slane %v436, 5
        %v439 = vor.u32 %v435, %v438
        %v440 = vrot.slane %v439, 4
        %v442 = vshll.u32 %v318, 16
        %v444 = vrot.slane %v442, 5
        %v445 = vsel %vm335, %v440, %v444
        %v446 = vshrl.u32 %v318, 16
        %v448 = vrot.slane %v446, 4
        %v449 = vor.u32 %v448, %v444
        %v450 = vrot.slane %v449, 4
        %v452 = vshll.u32 %v319, 16
        %v454 = vrot.slane %v452, 5
        %v455 = vsel %vm335, %v450, %v454
        %v457 = vshrl.u32 %v320, 16
        %v459 = vrot.slane %v457, 4
        %v460 = vshll.u32 %v320, 16
        %v462 = vrot.slane %v460, 5
        %v463 = vor.u32 %v459, %v462
        %v464 = vrot.slane %v463, 4
        %v466 = vshll.u32 %v321, 16
        %v468 = vrot.slane %v466, 5
        %v469 = vsel %vm335, %v464, %v468
        %v470 = vshrl.u32 %v321, 16
        %v472 = vrot.slane %v470, 4
        %v473 = vor.u32 %v472, %v468
        %v474 = vrot.slane %v473, 4
        %v476 = vshll.u32 %v322, 16
        %v478 = vrot.slane %v476, 5
        %v479 = vsel %vm335, %v474, %v478
        %v481 = vshrl.u32 %v323, 16
        %v483 = vrot.slane %v481, 4
        %v484 = vshll.u32 %v323, 16
        %v486 = vrot.slane %v484, 5
        %v487 = vor.u32 %v483, %v486
        %v488 = vrot.slane %v487, 4
        %v490 = vshll.u32 %v324, 16
        %v492 = vrot.slane %v490, 5
        %v493 = vsel %vm335, %v488, %v492
        %v494 = vshrl.u32 %v324, 16
        %v496 = vrot.slane %v494, 4
        %v497 = vor.u32 %v496, %v492
        %v498 = vrot.slane %v497, 4
        %v500 = vshll.u32 %v325, 16
        %v502 = vrot.slane %v500, 5
        %v503 = vsel %vm335, %v498, %v502
        %v505 = vshrl.u32 %v326, 16
        %v507 = vrot.slane %v505, 4
        %v508 = vshll.u32 %v326, 16
        %v510 = vrot.slane %v508, 5
        %v511 = vor.u32 %v507, %v510
        %v512 = vrot.slane %v511, 4
        %v514 = vshll.u32 %v327, 16
        %v516 = vrot.slane %v514, 5
        %v517 = vsel %vm335, %v512, %v516
        %v518 = vshrl.u32 %v327, 16
        %v520 = vrot.slane %v518, 4
        %v521 = vor.u32 %v520, %v516
        %v522 = vrot.slane %v521, 4
        %v524 = vshll.u32 %v328, 16
        %v526 = vrot.slane %v524, 5
        %v527 = vsel %vm335, %v522, %v526
        %s528 = scalar_lea.vmem [#allocation5], 16
        %v529 = vld [vmem:[%s528] sm:$0xf]
        %v530 = vld [vmem:[%s528 + $0x4] sm:$0xf]
        %v531 = vld [vmem:[%s528 + $0x8] sm:$0xf]
        %v532 = vld [vmem:[%s528 + $0xc] sm:$0xf]
        %v533 = vunpack.c.l.b16 %v349
        %v534 = vunpack.c.l.b16 %v359
        %v535 = vunpack.c.l.b16 %v373
        %v536 = vunpack.c.l.b16 %v383
        %v537 = vunpack.c.l.b16 %v397
        %v538 = vunpack.c.l.b16 %v407
        %v539 = vunpack.c.l.b16 %v421
        %v540 = vunpack.c.l.b16 %v431
        %v541 = vunpack.c.l.b16 %v445
        %v542 = vunpack.c.l.b16 %v455
        %v543 = vunpack.c.l.b16 %v469
        %v544 = vunpack.c.l.b16 %v479
        %v545 = vunpack.c.l.b16 %v493
        %v546 = vunpack.c.l.b16 %v503
        %v547 = vunpack.c.l.b16 %v517
        %v548 = vunpack.c.l.b16 %v527
        %v549 = vpack.c.b16 %v534, %v533
        %v550 = vpack.c.b16 %v536, %v535
        %v551 = vpack.c.b16 %v538, %v537
        %v552 = vpack.c.b16 %v540, %v539
        %v553 = vpack.c.b16 %v542, %v541
        %v554 = vpack.c.b16 %v544, %v543
        %v555 = vpack.c.b16 %v546, %v545
        %v556 = vpack.c.b16 %v548, %v547
        %v561 = vunpack.c.l.b16 %v529
        %v562 = vunpack.c.l.b16 %v530
        %v563 = vunpack.c.l.b16 %v531
        %v564 = vunpack.c.l.b16 %v532
        %v565 = vpack.c.b16 %v562, %v561
        %v566 = vpack.c.b16 %v564, %v563
        %vm569 = vcmask 261120
        %v571 = vsel %vm569, %v549, 0
        %v574 = vsel %vm569, %v550, 0
        %v577 = vsel %vm569, %v551, 0
        %v580 = vsel %vm569, %v552, 0
        %v583 = vsel %vm569, %v553, 0
        %v586 = vsel %vm569, %v554, 0
        %v589 = vsel %vm569, %v555, 0
        %v592 = vsel %vm569, %v556, 0
        %594 = vmatprep.subr.bf16.mxu0 0
        %595 = vmatpush1.bf16.msra.mxu0 %v565
        %596 = vmatprep.subr.bf16.mxu0 0
        %597 = vmatpush1.bf16.msra.mxu0 %v566
        %598 = vmatprep.subr.bf16.mxu0 0
        %599 = vmatpush1.bf16.msra.mxu0 0
        %600 = vmatprep.subr.bf16.mxu0 0
        %601 = vmatpush1.bf16.msra.mxu0 0
        %602 = vmatprep.subr.bf16.mxu0 0
        %603 = vmatpush1.bf16.msra.mxu0 0
        %604 = vmatprep.subr.bf16.mxu0 0
        %605 = vmatpush1.bf16.msra.mxu0 0
        %606 = vmatprep.subr.bf16.mxu0 0
        %607 = vmatpush1.bf16.msra.mxu0 0
        %608 = vmatprep.subr.bf16.mxu0 0
        %609 = vmatpush1.bf16.msra.mxu0 0
        %610 = vmatprep.subr.bf16.mxu0 0
        %611 = vmatpush1.bf16.msra.mxu0 0
        %612 = vmatprep.subr.bf16.mxu0 0
        %613 = vmatpush1.bf16.msra.mxu0 0
        %614 = vmatprep.subr.bf16.mxu0 0
        %615 = vmatpush1.bf16.msra.mxu0 0
        %616 = vmatprep.subr.bf16.mxu0 0
        %617 = vmatpush1.bf16.msra.mxu0 0
        %618 = vmatprep.subr.bf16.mxu0 0
        %619 = vmatpush1.bf16.msra.mxu0 0
        %620 = vmatprep.subr.bf16.mxu0 0
        %621 = vmatpush1.bf16.msra.mxu0 0
        %622 = vmatprep.subr.bf16.mxu0 0
        %623 = vmatpush1.bf16.msra.mxu0 0
        %624 = vmatprep.subr.bf16.mxu0 0
        %625 = vmatpush1.bf16.msra.mxu0 0
        %626 = vmatprep.mubr.bf16.mxu0 0
        %627 = vmatmul.mubr.bf16.gmra.mrb[0].mxu0 %v571
        %v628 = vpop.f32.mrb[0].mxu0
        %v629 = vadd.f32 0.0, %v628
        %v630 = vpop.f32.mrb[0].mxu0
        %v631 = vpop.f32.mrb[0].mxu0
        %v632 = vadd.f32 0.0, %v631
        %v633 = vpop.f32.mrb[0].mxu0
        %634 = vmatprep.mubr.bf16.mxu0 0
        %635 = vmatmul.mubr.bf16.gmra.mrb[0].mxu0 %v574
        %v636 = vpop.f32.mrb[0].mxu0
        %v637 = vadd.f32 0.0, %v636
        %v638 = vpop.f32.mrb[0].mxu0
        %v639 = vpop.f32.mrb[0].mxu0
        %v640 = vadd.f32 0.0, %v639
        %v641 = vpop.f32.mrb[0].mxu0
        %642 = vmatprep.mubr.bf16.mxu0 0
        %643 = vmatmul.mubr.bf16.gmra.mrb[0].mxu0 %v577
        %v644 = vpop.f32.mrb[0].mxu0
        %v645 = vadd.f32 0.0, %v644
        %v646 = vpop.f32.mrb[0].mxu0
        %v647 = vpop.f32.mrb[0].mxu0
        %v648 = vadd.f32 0.0, %v647
        %v649 = vpop.f32.mrb[0].mxu0
        %650 = vmatprep.mubr.bf16.mxu0 0
        %651 = vmatmul.mubr.bf16.gmra.mrb[0].mxu0 %v580
        %v652 = vpop.f32.mrb[0].mxu0
        %v653 = vadd.f32 0.0, %v652
        %v654 = vpop.f32.mrb[0].mxu0
        %v655 = vpop.f32.mrb[0].mxu0
        %v656 = vadd.f32 0.0, %v655
        %v657 = vpop.f32.mrb[0].mxu0
        %658 = vmatprep.mubr.bf16.mxu0 0
        %659 = vmatmul.mubr.bf16.gmra.mrb[0].mxu0 %v583
        %v660 = vpop.f32.mrb[0].mxu0
        %v661 = vadd.f32 0.0, %v660
        %v662 = vpop.f32.mrb[0].mxu0
        %v663 = vpop.f32.mrb[0].mxu0
        %v664 = vadd.f32 0.0, %v663
        %v665 = vpop.f32.mrb[0].mxu0
        %666 = vmatprep.mubr.bf16.mxu0 0
        %667 = vmatmul.mubr.bf16.gmra.mrb[0].mxu0 %v586
        %v668 = vpop.f32.mrb[0].mxu0
        %v669 = vadd.f32 0.0, %v668
        %v670 = vpop.f32.mrb[0].mxu0
        %v671 = vpop.f32.mrb[0].mxu0
        %v672 = vadd.f32 0.0, %v671
        %v673 = vpop.f32.mrb[0].mxu0
        %674 = vmatprep.mubr.bf16.mxu0 0
        %675 = vmatmul.mubr.bf16.gmra.mrb[0].mxu0 %v589
        %v676 = vpop.f32.mrb[0].mxu0
        %v677 = vadd.f32 0.0, %v676
        %v678 = vpop.f32.mrb[0].mxu0
        %v679 = vpop.f32.mrb[0].mxu0
        %v680 = vadd.f32 0.0, %v679
        %v681 = vpop.f32.mrb[0].mxu0
        %682 = vmatprep.mubr.bf16.mxu0 0
        %683 = vmatmul.mubr.bf16.gmra.mrb[0].mxu0 %v592
        %v684 = vpop.f32.mrb[0].mxu0
        %v685 = vadd.f32 0.0, %v684
        %v686 = vpop.f32.mrb[0].mxu0
        %v687 = vpop.f32.mrb[0].mxu0
        %v688 = vadd.f32 0.0, %v687
        %v689 = vpop.f32.mrb[0].mxu0
        %690 = vdwg.mxu0
        %v707 = vunpack.c.l.b16 %v305
        %v708 = vunpack.c.l.b16 %v306
        %v709 = vunpack.c.l.b16 %v308
        %v710 = vunpack.c.l.b16 %v309
        %v711 = vunpack.c.l.b16 %v311
        %v712 = vunpack.c.l.b16 %v312
        %v713 = vunpack.c.l.b16 %v314
        %v714 = vunpack.c.l.b16 %v315
        %v715 = vunpack.c.l.b16 %v317
        %v716 = vunpack.c.l.b16 %v318
        %v717 = vunpack.c.l.b16 %v320
        %v718 = vunpack.c.l.b16 %v321
        %v719 = vunpack.c.l.b16 %v323
        %v720 = vunpack.c.l.b16 %v324
        %v721 = vunpack.c.l.b16 %v326
        %v722 = vunpack.c.l.b16 %v327
        %v723 = vpack.c.b16 %v708, %v707
        %v724 = vpack.c.b16 %v710, %v709
        %v725 = vpack.c.b16 %v712, %v711
        %v726 = vpack.c.b16 %v714, %v713
        %v727 = vpack.c.b16 %v716, %v715
        %v728 = vpack.c.b16 %v718, %v717
        %v729 = vpack.c.b16 %v720, %v719
        %v730 = vpack.c.b16 %v722, %v721
        %v735 = vunpack.c.l.b16 %v329
        %v736 = vunpack.c.l.b16 %v330
        %v737 = vunpack.c.l.b16 %v331
        %v738 = vunpack.c.l.b16 %v332
        %v739 = vpack.c.b16 %v736, %v735
        %v740 = vpack.c.b16 %v738, %v737
        %v744 = vsel %vm569, %v723, 0
        %v747 = vsel %vm569, %v724, 0
        %v750 = vsel %vm569, %v725, 0
        %v753 = vsel %vm569, %v726, 0
        %v756 = vsel %vm569, %v727, 0
        %v759 = vsel %vm569, %v728, 0
        %v762 = vsel %vm569, %v729, 0
        %v765 = vsel %vm569, %v730, 0
        %767 = vmatprep.subr.bf16.mxu0 0
        %768 = vmatpush1.bf16.msra.mxu0 %v739
        %769 = vmatprep.subr.bf16.mxu0 0
        %770 = vmatpush1.bf16.msra.mxu0 %v740
        %771 = vmatprep.subr.bf16.mxu0 0
        %772 = vmatpush1.bf16.msra.mxu0 0
        %773 = vmatprep.subr.bf16.mxu0 0
        %774 = vmatpush1.bf16.msra.mxu0 0
        %775 = vmatprep.subr.bf16.mxu0 0
        %776 = vmatpush1.bf16.msra.mxu0 0
        %777 = vmatprep.subr.bf16.mxu0 0
        %778 = vmatpush1.bf16.msra.mxu0 0
        %779 = vmatprep.subr.bf16.mxu0 0
        %780 = vmatpush1.bf16.msra.mxu0 0
        %781 = vmatprep.subr.bf16.mxu0 0
        %782 = vmatpush1.bf16.msra.mxu0 0
        %783 = vmatprep.subr.bf16.mxu0 0
        %784 = vmatpush1.bf16.msra.mxu0 0
        %785 = vmatprep.subr.bf16.mxu0 0
        %786 = vmatpush1.bf16.msra.mxu0 0
        %787 = vmatprep.subr.bf16.mxu0 0
        %788 = vmatpush1.bf16.msra.mxu0 0
        %789 = vmatprep.subr.bf16.mxu0 0
        %790 = vmatpush1.bf16.msra.mxu0 0
        %791 = vmatprep.subr.bf16.mxu0 0
        %792 = vmatpush1.bf16.msra.mxu0 0
        %793 = vmatprep.subr.bf16.mxu0 0
        %794 = vmatpush1.bf16.msra.mxu0 0
        %795 = vmatprep.subr.bf16.mxu0 0
        %796 = vmatpush1.bf16.msra.mxu0 0
        %797 = vmatprep.subr.bf16.mxu0 0
        %798 = vmatpush1.bf16.msra.mxu0 0
        %799 = vmatprep.mubr.bf16.mxu0 0
        %800 = vmatmul.mubr.bf16.gmra.mrb[0].mxu0 %v744
        %v801 = vpop.f32.mrb[0].mxu0
        %v802 = vadd.f32 %v629, %v801
        %v803 = vpop.f32.mrb[0].mxu0
        %v804 = vpop.f32.mrb[0].mxu0
        %v805 = vadd.f32 %v632, %v804
        %v806 = vpop.f32.mrb[0].mxu0
        %807 = vmatprep.mubr.bf16.mxu0 0
        %808 = vmatmul.mubr.bf16.gmra.mrb[0].mxu0 %v747
        %v809 = vpop.f32.mrb[0].mxu0
        %v810 = vadd.f32 %v637, %v809
        %v811 = vpop.f32.mrb[0].mxu0
        %v812 = vpop.f32.mrb[0].mxu0
        %v813 = vadd.f32 %v640, %v812
        %v814 = vpop.f32.mrb[0].mxu0
        %815 = vmatprep.mubr.bf16.mxu0 0
        %816 = vmatmul.mubr.bf16.gmra.mrb[0].mxu0 %v750
        %v817 = vpop.f32.mrb[0].mxu0
        %v818 = vadd.f32 %v645, %v817
        %v819 = vpop.f32.mrb[0].mxu0
        %v820 = vpop.f32.mrb[0].mxu0
        %v821 = vadd.f32 %v648, %v820
        %v822 = vpop.f32.mrb[0].mxu0
        %823 = vmatprep.mubr.bf16.mxu0 0
        %824 = vmatmul.mubr.bf16.gmra.mrb[0].mxu0 %v753
        %v825 = vpop.f32.mrb[0].mxu0
        %v826 = vadd.f32 %v653, %v825
        %v827 = vpop.f32.mrb[0].mxu0
        %v828 = vpop.f32.mrb[0].mxu0
        %v829 = vadd.f32 %v656, %v828
        %v830 = vpop.f32.mrb[0].mxu0
        %831 = vmatprep.mubr.bf16.mxu0 0
        %832 = vmatmul.mubr.bf16.gmra.mrb[0].mxu0 %v756
        %v833 = vpop.f32.mrb[0].mxu0
        %v834 = vadd.f32 %v661, %v833
        %v835 = vpop.f32.mrb[0].mxu0
        %v836 = vpop.f32.mrb[0].mxu0
        %v837 = vadd.f32 %v664, %v836
        %v838 = vpop.f32.mrb[0].mxu0
        %839 = vmatprep.mubr.bf16.mxu0 0
        %840 = vmatmul.mubr.bf16.gmra.mrb[0].mxu0 %v759
        %v841 = vpop.f32.mrb[0].mxu0
        %v842 = vadd.f32 %v669, %v841
        %v843 = vpop.f32.mrb[0].mxu0
        %v844 = vpop.f32.mrb[0].mxu0
        %v845 = vadd.f32 %v672, %v844
        %v846 = vpop.f32.mrb[0].mxu0
        %847 = vmatprep.mubr.bf16.mxu0 0
        %848 = vmatmul.mubr.bf16.gmra.mrb[0].mxu0 %v762
        %v849 = vpop.f32.mrb[0].mxu0
        %v850 = vadd.f32 %v677, %v849
        %v851 = vpop.f32.mrb[0].mxu0
        %v852 = vpop.f32.mrb[0].mxu0
        %v853 = vadd.f32 %v680, %v852
        %v854 = vpop.f32.mrb[0].mxu0
        %855 = vmatprep.mubr.bf16.mxu0 0
        %856 = vmatmul.mubr.bf16.gmra.mrb[0].mxu0 %v765
        %v857 = vpop.f32.mrb[0].mxu0
        %v858 = vadd.f32 %v685, %v857
        %v859 = vpop.f32.mrb[0].mxu0
        %v860 = vpop.f32.mrb[0].mxu0
        %v861 = vadd.f32 %v688, %v860
        %v862 = vpop.f32.mrb[0].mxu0
        %863 = vdwg.mxu0
        %vm872 = vcmask 1042432
        %vm873 = vcmask 1046532
        %vm874 = vmor %vm872, %vm873
        %v875 = vrot.slane %v305, 5
        %v876 = vrot.slane %v875, 4
        %v877 = vrot.slane %v306, 5
        %v878 = vsel %vm874, %v876, %v877
        %v879 = vrot.slane %v877, 4
        %v880 = vrot.slane %v307, 5
        %v881 = vsel %vm874, %v879, %v880
        %v882 = vrot.slane %v308, 5
        %v883 = vrot.slane %v882, 4
        %v884 = vrot.slane %v309, 5
        %v885 = vsel %vm874, %v883, %v884
        %v886 = vrot.slane %v884, 4
        %v887 = vrot.slane %v310, 5
        %v888 = vsel %vm874, %v886, %v887
        %v889 = vrot.slane %v311, 5
        %v890 = vrot.slane %v889, 4
        %v891 = vrot.slane %v312, 5
        %v892 = vsel %vm874, %v890, %v891
        %v893 = vrot.slane %v891, 4
        %v894 = vrot.slane %v313, 5
        %v895 = vsel %vm874, %v893, %v894
        %v896 = vrot.slane %v314, 5
        %v897 = vrot.slane %v896, 4
        %v898 = vrot.slane %v315, 5
        %v899 = vsel %vm874, %v897, %v898
        %v900 = vrot.slane %v898, 4
        %v901 = vrot.slane %v316, 5
        %v902 = vsel %vm874, %v900, %v901
        %v903 = vrot.slane %v317, 5
        %v904 = vrot.slane %v903, 4
        %v905 = vrot.slane %v318, 5
        %v906 = vsel %vm874, %v904, %v905
        %v907 = vrot.slane %v905, 4
        %v908 = vrot.slane %v319, 5
        %v909 = vsel %vm874, %v907, %v908
        %v910 = vrot.slane %v320, 5
        %v911 = vrot.slane %v910, 4
        %v912 = vrot.slane %v321, 5
        %v913 = vsel %vm874, %v911, %v912
        %v914 = vrot.slane %v912, 4
        %v915 = vrot.slane %v322, 5
        %v916 = vsel %vm874, %v914, %v915
        %v917 = vrot.slane %v323, 5
        %v918 = vrot.slane %v917, 4
        %v919 = vrot.slane %v324, 5
        %v920 = vsel %vm874, %v918, %v919
        %v921 = vrot.slane %v919, 4
        %v922 = vrot.slane %v325, 5
        %v923 = vsel %vm874, %v921, %v922
        %v924 = vrot.slane %v326, 5
        %v925 = vrot.slane %v924, 4
        %v926 = vrot.slane %v327, 5
        %v927 = vsel %vm874, %v925, %v926
        %v928 = vrot.slane %v926, 4
        %v929 = vrot.slane %v328, 5
        %v930 = vsel %vm874, %v928, %v929
        %s931 = scalar_lea.vmem [#allocation5], 32
        %v932 = vld [vmem:[%s931] sm:$0xf]
        %v933 = vld [vmem:[%s931 + $0x4] sm:$0xf]
        %v934 = vld [vmem:[%s931 + $0x8] sm:$0xf]
        %v935 = vld [vmem:[%s931 + $0xc] sm:$0xf]
        %v936 = vunpack.c.l.b16 %v878
        %v937 = vunpack.c.l.b16 %v881
        %v938 = vunpack.c.l.b16 %v885
        %v939 = vunpack.c.l.b16 %v888
        %v940 = vunpack.c.l.b16 %v892
        %v941 = vunpack.c.l.b16 %v895
        %v942 = vunpack.c.l.b16 %v899
        %v943 = vunpack.c.l.b16 %v902
        %v944 = vunpack.c.l.b16 %v906
        %v945 = vunpack.c.l.b16 %v909
        %v946 = vunpack.c.l.b16 %v913
        %v947 = vunpack.c.l.b16 %v916
        %v948 = vunpack.c.l.b16 %v920
        %v949 = vunpack.c.l.b16 %v923
        %v950 = vunpack.c.l.b16 %v927
        %v951 = vunpack.c.l.b16 %v930
        %v952 = vpack.c.b16 %v937, %v936
        %v953 = vpack.c.b16 %v939, %v938
        %v954 = vpack.c.b16 %v941, %v940
        %v955 = vpack.c.b16 %v943, %v942
        %v956 = vpack.c.b16 %v945, %v944
        %v957 = vpack.c.b16 %v947, %v946
        %v958 = vpack.c.b16 %v949, %v948
        %v959 = vpack.c.b16 %v951, %v950
        %v964 = vunpack.c.l.b16 %v932
        %v965 = vunpack.c.l.b16 %v933
        %v966 = vunpack.c.l.b16 %v934
        %v967 = vunpack.c.l.b16 %v935
        %v968 = vpack.c.b16 %v965, %v964
        %v969 = vpack.c.b16 %v967, %v966
        %v973 = vsel %vm569, %v952, 0
        %v976 = vsel %vm569, %v953, 0
        %v979 = vsel %vm569, %v954, 0
        %v982 = vsel %vm569, %v955, 0
        %v985 = vsel %vm569, %v956, 0
        %v988 = vsel %vm569, %v957, 0
        %v991 = vsel %vm569, %v958, 0
        %v994 = vsel %vm569, %v959, 0
        %996 = vmatprep.subr.bf16.mxu0 0
        %997 = vmatpush1.bf16.msra.mxu0 %v968
        %998 = vmatprep.subr.bf16.mxu0 0
        %999 = vmatpush1.bf16.msra.mxu0 %v969
        %1000 = vmatprep.subr.bf16.mxu0 0
        %1001 = vmatpush1.bf16.msra.mxu0 0
        %1002 = vmatprep.subr.bf16.mxu0 0
        %1003 = vmatpush1.bf16.msra.mxu0 0
        %1004 = vmatprep.subr.bf16.mxu0 0
        %1005 = vmatpush1.bf16.msra.mxu0 0
        %1006 = vmatprep.subr.bf16.mxu0 0
        %1007 = vmatpush1.bf16.msra.mxu0 0
        %1008 = vmatprep.subr.bf16.mxu0 0
        %1009 = vmatpush1.bf16.msra.mxu0 0
        %1010 = vmatprep.subr.bf16.mxu0 0
        %1011 = vmatpush1.bf16.msra.mxu0 0
        %1012 = vmatprep.subr.bf16.mxu0 0
        %1013 = vmatpush1.bf16.msra.mxu0 0
        %1014 = vmatprep.subr.bf16.mxu0 0
        %1015 = vmatpush1.bf16.msra.mxu0 0
        %1016 = vmatprep.subr.bf16.mxu0 0
        %1017 = vmatpush1.bf16.msra.mxu0 0
        %1018 = vmatprep.subr.bf16.mxu0 0
        %1019 = vmatpush1.bf16.msra.mxu0 0
        %1020 = vmatprep.subr.bf16.mxu0 0
        %1021 = vmatpush1.bf16.msra.mxu0 0
        %1022 = vmatprep.subr.bf16.mxu0 0
        %1023 = vmatpush1.bf16.msra.mxu0 0
        %1024 = vmatprep.subr.bf16.mxu0 0
        %1025 = vmatpush1.bf16.msra.mxu0 0
        %1026 = vmatprep.subr.bf16.mxu0 0
        %1027 = vmatpush1.bf16.msra.mxu0 0
        %1028 = vmatprep.mubr.bf16.mxu0 0
        %1029 = vmatmul.mubr.bf16.gmra.mrb[0].mxu0 %v973
        %v1030 = vpop.f32.mrb[0].mxu0
        %v1031 = vadd.f32 0.0, %v1030
        %v1032 = vpop.f32.mrb[0].mxu0
        %v1033 = vpop.f32.mrb[0].mxu0
        %v1034 = vadd.f32 0.0, %v1033
        %v1035 = vpop.f32.mrb[0].mxu0
        %1036 = vmatprep.mubr.bf16.mxu0 0
        %1037 = vmatmul.mubr.bf16.gmra.mrb[0].mxu0 %v976
        %v1038 = vpop.f32.mrb[0].mxu0
        %v1039 = vadd.f32 0.0, %v1038
        %v1040 = vpop.f32.mrb[0].mxu0
        %v1041 = vpop.f32.mrb[0].mxu0
        %v1042 = vadd.f32 0.0, %v1041
        %v1043 = vpop.f32.mrb[0].mxu0
        %1044 = vmatprep.mubr.bf16.mxu0 0
        %1045 = vmatmul.mubr.bf16.gmra.mrb[0].mxu0 %v979
        %v1046 = vpop.f32.mrb[0].mxu0
        %v1047 = vadd.f32 0.0, %v1046
        %v1048 = vpop.f32.mrb[0].mxu0
        %v1049 = vpop.f32.mrb[0].mxu0
        %v1050 = vadd.f32 0.0, %v1049
        %v1051 = vpop.f32.mrb[0].mxu0
        %1052 = vmatprep.mubr.bf16.mxu0 0
        %1053 = vmatmul.mubr.bf16.gmra.mrb[0].mxu0 %v982
        %v1054 = vpop.f32.mrb[0].mxu0
        %v1055 = vadd.f32 0.0, %v1054
        %v1056 = vpop.f32.mrb[0].mxu0
        %v1057 = vpop.f32.mrb[0].mxu0
        %v1058 = vadd.f32 0.0, %v1057
        %v1059 = vpop.f32.mrb[0].mxu0
        %1060 = vmatprep.mubr.bf16.mxu0 0
        %1061 = vmatmul.mubr.bf16.gmra.mrb[0].mxu0 %v985
        %v1062 = vpop.f32.mrb[0].mxu0
        %v1063 = vadd.f32 0.0, %v1062
        %v1064 = vpop.f32.mrb[0].mxu0
        %v1065 = vpop.f32.mrb[0].mxu0
        %v1066 = vadd.f32 0.0, %v1065
        %v1067 = vpop.f32.mrb[0].mxu0
        %1068 = vmatprep.mubr.bf16.mxu0 0
        %1069 = vmatmul.mubr.bf16.gmra.mrb[0].mxu0 %v988
        %v1070 = vpop.f32.mrb[0].mxu0
        %v1071 = vadd.f32 0.0, %v1070
        %v1072 = vpop.f32.mrb[0].mxu0
        %v1073 = vpop.f32.mrb[0].mxu0
        %v1074 = vadd.f32 0.0, %v1073
        %v1075 = vpop.f32.mrb[0].mxu0
        %1076 = vmatprep.mubr.bf16.mxu0 0
        %1077 = vmatmul.mubr.bf16.gmra.mrb[0].mxu0 %v991
        %v1078 = vpop.f32.mrb[0].mxu0
        %v1079 = vadd.f32 0.0, %v1078
        %v1080 = vpop.f32.mrb[0].mxu0
        %v1081 = vpop.f32.mrb[0].mxu0
        %v1082 = vadd.f32 0.0, %v1081
        %v1083 = vpop.f32.mrb[0].mxu0
        %1084 = vmatprep.mubr.bf16.mxu0 0
        %1085 = vmatmul.mubr.bf16.gmra.mrb[0].mxu0 %v994
        %v1086 = vpop.f32.mrb[0].mxu0
        %v1087 = vadd.f32 0.0, %v1086
        %v1088 = vpop.f32.mrb[0].mxu0
        %v1089 = vpop.f32.mrb[0].mxu0
        %v1090 = vadd.f32 0.0, %v1089
        %v1091 = vpop.f32.mrb[0].mxu0
        %1092 = vdwg.mxu0
        %v1093 = vadd.f32 %v802, %v1031
        %v1094 = vadd.f32 %v805, %v1034
        %v1095 = vadd.f32 %v810, %v1039
        %v1096 = vadd.f32 %v813, %v1042
        %v1097 = vadd.f32 %v818, %v1047
        %v1098 = vadd.f32 %v821, %v1050
        %v1099 = vadd.f32 %v826, %v1055
        %v1100 = vadd.f32 %v829, %v1058
        %v1101 = vadd.f32 %v834, %v1063
        %v1102 = vadd.f32 %v837, %v1066
        %v1103 = vadd.f32 %v842, %v1071
        %v1104 = vadd.f32 %v845, %v1074
        %v1105 = vadd.f32 %v850, %v1079
        %v1106 = vadd.f32 %v853, %v1082
        %v1107 = vadd.f32 %v858, %v1087
        %v1108 = vadd.f32 %v861, %v1090
        %s1109 = scalar_lea.vmem %s265, 96 [#allocation2]
        %v1110 = vld [vmem:[%s1109] sm:$0xf]
        %v1111 = vld [vmem:[%s1109 + $0x4] sm:$0xf]
        %v1112 = vld [vmem:[%s1109 + $0x8] sm:$0x1]
        %v1113 = vld [vmem:[%s1109 + $0xc] sm:$0xf]
        %v1114 = vld [vmem:[%s1109 + $0x10] sm:$0xf]
        %v1115 = vld [vmem:[%s1109 + $0x14] sm:$0x1]
        %v1116 = vld [vmem:[%s1109 + $0x18] sm:$0xf]
        %v1117 = vld [vmem:[%s1109 + $0x1c] sm:$0xf]
        %v1118 = vld [vmem:[%s1109 + $0x20] sm:$0x1]
        %v1119 = vld [vmem:[%s1109 + $0x24] sm:$0xf]
        %v1120 = vld [vmem:[%s1109 + $0x28] sm:$0xf]
        %v1121 = vld [vmem:[%s1109 + $0x2c] sm:$0x1]
        %v1122 = vld [vmem:[%s1109 + $0x30] sm:$0xf]
        %v1123 = vld [vmem:[%s1109 + $0x34] sm:$0xf]
        %v1124 = vld [vmem:[%s1109 + $0x38] sm:$0x1]
        %v1125 = vld [vmem:[%s1109 + $0x3c] sm:$0xf]
        %v1126 = vld [vmem:[%s1109 + $0x40] sm:$0xf]
        %v1127 = vld [vmem:[%s1109 + $0x44] sm:$0x1]
        %v1128 = vld [vmem:[%s1109 + $0x48] sm:$0xf]
        %v1129 = vld [vmem:[%s1109 + $0x4c] sm:$0xf]
        %v1130 = vld [vmem:[%s1109 + $0x50] sm:$0x1]
        %v1131 = vld [vmem:[%s1109 + $0x54] sm:$0xf]
        %v1132 = vld [vmem:[%s1109 + $0x58] sm:$0xf]
        %v1133 = vld [vmem:[%s1109 + $0x5c] sm:$0x1]
        %s1134 = scalar_lea.vmem [#allocation5], 48
        %v1135 = vld [vmem:[%s1134] sm:$0xf]
        %v1136 = vld [vmem:[%s1134 + $0x4] sm:$0xf]
        %v1137 = vld [vmem:[%s1134 + $0x8] sm:$0xf]
        %v1138 = vld [vmem:[%s1134 + $0xc] sm:$0xf]
        %v1155 = vunpack.c.l.b16 %v1110
        %v1156 = vunpack.c.l.b16 %v1111
        %v1157 = vunpack.c.l.b16 %v1113
        %v1158 = vunpack.c.l.b16 %v1114
        %v1159 = vunpack.c.l.b16 %v1116
        %v1160 = vunpack.c.l.b16 %v1117
        %v1161 = vunpack.c.l.b16 %v1119
        %v1162 = vunpack.c.l.b16 %v1120
        %v1163 = vunpack.c.l.b16 %v1122
        %v1164 = vunpack.c.l.b16 %v1123
        %v1165 = vunpack.c.l.b16 %v1125
        %v1166 = vunpack.c.l.b16 %v1126
        %v1167 = vunpack.c.l.b16 %v1128
        %v1168 = vunpack.c.l.b16 %v1129
        %v1169 = vunpack.c.l.b16 %v1131
        %v1170 = vunpack.c.l.b16 %v1132
        %v1171 = vpack.c.b16 %v1156, %v1155
        %v1172 = vpack.c.b16 %v1158, %v1157
        %v1173 = vpack.c.b16 %v1160, %v1159
        %v1174 = vpack.c.b16 %v1162, %v1161
        %v1175 = vpack.c.b16 %v1164, %v1163
        %v1176 = vpack.c.b16 %v1166, %v1165
        %v1177 = vpack.c.b16 %v1168, %v1167
        %v1178 = vpack.c.b16 %v1170, %v1169
        %v1183 = vunpack.c.l.b16 %v1135
        %v1184 = vunpack.c.l.b16 %v1136
        %v1185 = vunpack.c.l.b16 %v1137
        %v1186 = vunpack.c.l.b16 %v1138
        %v1187 = vpack.c.b16 %v1184, %v1183
        %v1188 = vpack.c.b16 %v1186, %v1185
        %v1192 = vsel %vm569, %v1171, 0
        %v1195 = vsel %vm569, %v1172, 0
        %v1198 = vsel %vm569, %v1173, 0
        %v1201 = vsel %vm569, %v1174, 0
        %v1204 = vsel %vm569, %v1175, 0
        %v1207 = vsel %vm569, %v1176, 0
        %v1210 = vsel %vm569, %v1177, 0
        %v1213 = vsel %vm569, %v1178, 0
        %1215 = vmatprep.subr.bf16.mxu0 0
        %1216 = vmatpush1.bf16.msra.mxu0 %v1187
        %1217 = vmatprep.subr.bf16.mxu0 0
        %1218 = vmatpush1.bf16.msra.mxu0 %v1188
        %1219 = vmatprep.subr.bf16.mxu0 0
        %1220 = vmatpush1.bf16.msra.mxu0 0
        %1221 = vmatprep.subr.bf16.mxu0 0
        %1222 = vmatpush1.bf16.msra.mxu0 0
        %1223 = vmatprep.subr.bf16.mxu0 0
        %1224 = vmatpush1.bf16.msra.mxu0 0
        %1225 = vmatprep.subr.bf16.mxu0 0
        %1226 = vmatpush1.bf16.msra.mxu0 0
        %1227 = vmatprep.subr.bf16.mxu0 0
        %1228 = vmatpush1.bf16.msra.mxu0 0
        %1229 = vmatprep.subr.bf16.mxu0 0
        %1230 = vmatpush1.bf16.msra.mxu0 0
        %1231 = vmatprep.subr.bf16.mxu0 0
        %1232 = vmatpush1.bf16.msra.mxu0 0
        %1233 = vmatprep.subr.bf16.mxu0 0
        %1234 = vmatpush1.bf16.msra.mxu0 0
        %1235 = vmatprep.subr.bf16.mxu0 0
        %1236 = vmatpush1.bf16.msra.mxu0 0
        %1237 = vmatprep.subr.bf16.mxu0 0
        %1238 = vmatpush1.bf16.msra.mxu0 0
        %1239 = vmatprep.subr.bf16.mxu0 0
        %1240 = vmatpush1.bf16.msra.mxu0 0
        %1241 = vmatprep.subr.bf16.mxu0 0
        %1242 = vmatpush1.bf16.msra.mxu0 0
        %1243 = vmatprep.subr.bf16.mxu0 0
        %1244 = vmatpush1.bf16.msra.mxu0 0
        %1245 = vmatprep.subr.bf16.mxu0 0
        %1246 = vmatpush1.bf16.msra.mxu0 0
        %1247 = vmatprep.mubr.bf16.mxu0 0
        %1248 = vmatmul.mubr.bf16.gmra.mrb[0].mxu0 %v1192
        %v1249 = vpop.f32.mrb[0].mxu0
        %v1250 = vadd.f32 0.0, %v1249
        %v1251 = vpop.f32.mrb[0].mxu0
        %v1252 = vpop.f32.mrb[0].mxu0
        %v1253 = vadd.f32 0.0, %v1252
        %v1254 = vpop.f32.mrb[0].mxu0
        %1255 = vmatprep.mubr.bf16.mxu0 0
        %1256 = vmatmul.mubr.bf16.gmra.mrb[0].mxu0 %v1195
        %v1257 = vpop.f32.mrb[0].mxu0
        %v1258 = vadd.f32 0.0, %v1257
        %v1259 = vpop.f32.mrb[0].mxu0
        %v1260 = vpop.f32.mrb[0].mxu0
        %v1261 = vadd.f32 0.0, %v1260
        %v1262 = vpop.f32.mrb[0].mxu0
        %1263 = vmatprep.mubr.bf16.mxu0 0
        %1264 = vmatmul.mubr.bf16.gmra.mrb[0].mxu0 %v1198
        %v1265 = vpop.f32.mrb[0].mxu0
        %v1266 = vadd.f32 0.0, %v1265
        %v1267 = vpop.f32.mrb[0].mxu0
        %v1268 = vpop.f32.mrb[0].mxu0
        %v1269 = vadd.f32 0.0, %v1268
        %v1270 = vpop.f32.mrb[0].mxu0
        %1271 = vmatprep.mubr.bf16.mxu0 0
        %1272 = vmatmul.mubr.bf16.gmra.mrb[0].mxu0 %v1201
        %v1273 = vpop.f32.mrb[0].mxu0
        %v1274 = vadd.f32 0.0, %v1273
        %v1275 = vpop.f32.mrb[0].mxu0
        %v1276 = vpop.f32.mrb[0].mxu0
        %v1277 = vadd.f32 0.0, %v1276
        %v1278 = vpop.f32.mrb[0].mxu0
        %1279 = vmatprep.mubr.bf16.mxu0 0
        %1280 = vmatmul.mubr.bf16.gmra.mrb[0].mxu0 %v1204
        %v1281 = vpop.f32.mrb[0].mxu0
        %v1282 = vadd.f32 0.0, %v1281
        %v1283 = vpop.f32.mrb[0].mxu0
        %v1284 = vpop.f32.mrb[0].mxu0
        %v1285 = vadd.f32 0.0, %v1284
        %v1286 = vpop.f32.mrb[0].mxu0
        %1287 = vmatprep.mubr.bf16.mxu0 0
        %1288 = vmatmul.mubr.bf16.gmra.mrb[0].mxu0 %v1207
        %v1289 = vpop.f32.mrb[0].mxu0
        %v1290 = vadd.f32 0.0, %v1289
        %v1291 = vpop.f32.mrb[0].mxu0
        %v1292 = vpop.f32.mrb[0].mxu0
        %v1293 = vadd.f32 0.0, %v1292
        %v1294 = vpop.f32.mrb[0].mxu0
        %1295 = vmatprep.mubr.bf16.mxu0 0
        %1296 = vmatmul.mubr.bf16.gmra.mrb[0].mxu0 %v1210
        %v1297 = vpop.f32.mrb[0].mxu0
        %v1298 = vadd.f32 0.0, %v1297
        %v1299 = vpop.f32.mrb[0].mxu0
        %v1300 = vpop.f32.mrb[0].mxu0
        %v1301 = vadd.f32 0.0, %v1300
        %v1302 = vpop.f32.mrb[0].mxu0
        %1303 = vmatprep.mubr.bf16.mxu0 0
        %1304 = vmatmul.mubr.bf16.gmra.mrb[0].mxu0 %v1213
        %v1305 = vpop.f32.mrb[0].mxu0
        %v1306 = vadd.f32 0.0, %v1305
        %v1307 = vpop.f32.mrb[0].mxu0
        %v1308 = vpop.f32.mrb[0].mxu0
        %v1309 = vadd.f32 0.0, %v1308
        %v1310 = vpop.f32.mrb[0].mxu0
        %1311 = vdwg.mxu0
        %v1312 = vadd.f32 %v1093, %v1250
        %v1313 = vadd.f32 %v1094, %v1253
        %v1314 = vadd.f32 %v1095, %v1258
        %v1315 = vadd.f32 %v1096, %v1261
        %v1316 = vadd.f32 %v1097, %v1266
        %v1317 = vadd.f32 %v1098, %v1269
        %v1318 = vadd.f32 %v1099, %v1274
        %v1319 = vadd.f32 %v1100, %v1277
        %v1320 = vadd.f32 %v1101, %v1282
        %v1321 = vadd.f32 %v1102, %v1285
        %v1322 = vadd.f32 %v1103, %v1290
        %v1323 = vadd.f32 %v1104, %v1293
        %v1324 = vadd.f32 %v1105, %v1298
        %v1325 = vadd.f32 %v1106, %v1301
        %v1326 = vadd.f32 %v1107, %v1306
        %v1327 = vadd.f32 %v1108, %v1309
        %v1329 = vshrl.u32 %v1110, 16
        %v1331 = vrot.slane %v1329, 4
        %v1332 = vshll.u32 %v1110, 16
        %v1334 = vrot.slane %v1332, 5
        %v1335 = vor.u32 %v1331, %v1334
        %v1336 = vrot.slane %v1335, 4
        %v1338 = vshll.u32 %v1111, 16
        %v1340 = vrot.slane %v1338, 5
        %v1341 = vsel %vm335, %v1336, %v1340
        %v1342 = vshrl.u32 %v1111, 16
        %v1344 = vrot.slane %v1342, 4
        %v1345 = vor.u32 %v1344, %v1340
        %v1346 = vrot.slane %v1345, 4
        %v1348 = vshll.u32 %v1112, 16
        %v1350 = vrot.slane %v1348, 5
        %v1351 = vsel %vm335, %v1346, %v1350
        %v1353 = vshrl.u32 %v1113, 16
        %v1355 = vrot.slane %v1353, 4
        %v1356 = vshll.u32 %v1113, 16
        %v1358 = vrot.slane %v1356, 5
        %v1359 = vor.u32 %v1355, %v1358
        %v1360 = vrot.slane %v1359, 4
        %v1362 = vshll.u32 %v1114, 16
        %v1364 = vrot.slane %v1362, 5
        %v1365 = vsel %vm335, %v1360, %v1364
        %v1366 = vshrl.u32 %v1114, 16
        %v1368 = vrot.slane %v1366, 4
        %v1369 = vor.u32 %v1368, %v1364
        %v1370 = vrot.slane %v1369, 4
        %v1372 = vshll.u32 %v1115, 16
        %v1374 = vrot.slane %v1372, 5
        %v1375 = vsel %vm335, %v1370, %v1374
        %v1377 = vshrl.u32 %v1116, 16
        %v1379 = vrot.slane %v1377, 4
        %v1380 = vshll.u32 %v1116, 16
        %v1382 = vrot.slane %v1380, 5
        %v1383 = vor.u32 %v1379, %v1382
        %v1384 = vrot.slane %v1383, 4
        %v1386 = vshll.u32 %v1117, 16
        %v1388 = vrot.slane %v1386, 5
        %v1389 = vsel %vm335, %v1384, %v1388
        %v1390 = vshrl.u32 %v1117, 16
        %v1392 = vrot.slane %v1390, 4
        %v1393 = vor.u32 %v1392, %v1388
        %v1394 = vrot.slane %v1393, 4
        %v1396 = vshll.u32 %v1118, 16
        %v1398 = vrot.slane %v1396, 5
        %v1399 = vsel %vm335, %v1394, %v1398
        %v1401 = vshrl.u32 %v1119, 16
        %v1403 = vrot.slane %v1401, 4
        %v1404 = vshll.u32 %v1119, 16
        %v1406 = vrot.slane %v1404, 5
        %v1407 = vor.u32 %v1403, %v1406
        %v1408 = vrot.slane %v1407, 4
        %v1410 = vshll.u32 %v1120, 16
        %v1412 = vrot.slane %v1410, 5
        %v1413 = vsel %vm335, %v1408, %v1412
        %v1414 = vshrl.u32 %v1120, 16
        %v1416 = vrot.slane %v1414, 4
        %v1417 = vor.u32 %v1416, %v1412
        %v1418 = vrot.slane %v1417, 4
        %v1420 = vshll.u32 %v1121, 16
        %v1422 = vrot.slane %v1420, 5
        %v1423 = vsel %vm335, %v1418, %v1422
        %v1425 = vshrl.u32 %v1122, 16
        %v1427 = vrot.slane %v1425, 4
        %v1428 = vshll.u32 %v1122, 16
        %v1430 = vrot.slane %v1428, 5
        %v1431 = vor.u32 %v1427, %v1430
        %v1432 = vrot.slane %v1431, 4
        %v1434 = vshll.u32 %v1123, 16
        %v1436 = vrot.slane %v1434, 5
        %v1437 = vsel %vm335, %v1432, %v1436
        %v1438 = vshrl.u32 %v1123, 16
        %v1440 = vrot.slane %v1438, 4
        %v1441 = vor.u32 %v1440, %v1436
        %v1442 = vrot.slane %v1441, 4
        %v1444 = vshll.u32 %v1124, 16
        %v1446 = vrot.slane %v1444, 5
        %v1447 = vsel %vm335, %v1442, %v1446
        %v1449 = vshrl.u32 %v1125, 16
        %v1451 = vrot.slane %v1449, 4
        %v1452 = vshll.u32 %v1125, 16
        %v1454 = vrot.slane %v1452, 5
        %v1455 = vor.u32 %v1451, %v1454
        %v1456 = vrot.slane %v1455, 4
        %v1458 = vshll.u32 %v1126, 16
        %v1460 = vrot.slane %v1458, 5
        %v1461 = vsel %vm335, %v1456, %v1460
        %v1462 = vshrl.u32 %v1126, 16
        %v1464 = vrot.slane %v1462, 4
        %v1465 = vor.u32 %v1464, %v1460
        %v1466 = vrot.slane %v1465, 4
        %v1468 = vshll.u32 %v1127, 16
        %v1470 = vrot.slane %v1468, 5
        %v1471 = vsel %vm335, %v1466, %v1470
        %v1473 = vshrl.u32 %v1128, 16
        %v1475 = vrot.slane %v1473, 4
        %v1476 = vshll.u32 %v1128, 16
        %v1478 = vrot.slane %v1476, 5
        %v1479 = vor.u32 %v1475, %v1478
        %v1480 = vrot.slane %v1479, 4
        %v1482 = vshll.u32 %v1129, 16
        %v1484 = vrot.slane %v1482, 5
        %v1485 = vsel %vm335, %v1480, %v1484
        %v1486 = vshrl.u32 %v1129, 16
        %v1488 = vrot.slane %v1486, 4
        %v1489 = vor.u32 %v1488, %v1484
        %v1490 = vrot.slane %v1489, 4
        %v1492 = vshll.u32 %v1130, 16
        %v1494 = vrot.slane %v1492, 5
        %v1495 = vsel %vm335, %v1490, %v1494
        %v1497 = vshrl.u32 %v1131, 16
        %v1499 = vrot.slane %v1497, 4
        %v1500 = vshll.u32 %v1131, 16
        %v1502 = vrot.slane %v1500, 5
        %v1503 = vor.u32 %v1499, %v1502
        %v1504 = vrot.slane %v1503, 4
        %v1506 = vshll.u32 %v1132, 16
        %v1508 = vrot.slane %v1506, 5
        %v1509 = vsel %vm335, %v1504, %v1508
        %v1510 = vshrl.u32 %v1132, 16
        %v1512 = vrot.slane %v1510, 4
        %v1513 = vor.u32 %v1512, %v1508
        %v1514 = vrot.slane %v1513, 4
        %v1516 = vshll.u32 %v1133, 16
        %v1518 = vrot.slane %v1516, 5
        %v1519 = vsel %vm335, %v1514, %v1518
        %s1520 = scalar_lea.vmem [#allocation5], 64
        %v1521 = vld [vmem:[%s1520] sm:$0xf]
        %v1522 = vld [vmem:[%s1520 + $0x4] sm:$0xf]
        %v1523 = vld [vmem:[%s1520 + $0x8] sm:$0xf]
        %v1524 = vld [vmem:[%s1520 + $0xc] sm:$0xf]
        %v1525 = vunpack.c.l.b16 %v1341
        %v1526 = vunpack.c.l.b16 %v1351
        %v1527 = vunpack.c.l.b16 %v1365
        %v1528 = vunpack.c.l.b16 %v1375
        %v1529 = vunpack.c.l.b16 %v1389
        %v1530 = vunpack.c.l.b16 %v1399
        %v1531 = vunpack.c.l.b16 %v1413
        %v1532 = vunpack.c.l.b16 %v1423
        %v1533 = vunpack.c.l.b16 %v1437
        %v1534 = vunpack.c.l.b16 %v1447
        %v1535 = vunpack.c.l.b16 %v1461
        %v1536 = vunpack.c.l.b16 %v1471
        %v1537 = vunpack.c.l.b16 %v1485
        %v1538 = vunpack.c.l.b16 %v1495
        %v1539 = vunpack.c.l.b16 %v1509
        %v1540 = vunpack.c.l.b16 %v1519
        %v1541 = vpack.c.b16 %v1526, %v1525
        %v1542 = vpack.c.b16 %v1528, %v1527
        %v1543 = vpack.c.b16 %v1530, %v1529
        %v1544 = vpack.c.b16 %v1532, %v1531
        %v1545 = vpack.c.b16 %v1534, %v1533
        %v1546 = vpack.c.b16 %v1536, %v1535
        %v1547 = vpack.c.b16 %v1538, %v1537
        %v1548 = vpack.c.b16 %v1540, %v1539
        %v1553 = vunpack.c.l.b16 %v1521
        %v1554 = vunpack.c.l.b16 %v1522
        %v1555 = vunpack.c.l.b16 %v1523
        %v1556 = vunpack.c.l.b16 %v1524
        %v1557 = vpack.c.b16 %v1554, %v1553
        %v1558 = vpack.c.b16 %v1556, %v1555
        %v1562 = vsel %vm569, %v1541, 0
        %v1565 = vsel %vm569, %v1542, 0
        %v1568 = vsel %vm569, %v1543, 0
        %v1571 = vsel %vm569, %v1544, 0
        %v1574 = vsel %vm569, %v1545, 0
        %v1577 = vsel %vm569, %v1546, 0
        %v1580 = vsel %vm569, %v1547, 0
        %v1583 = vsel %vm569, %v1548, 0
        %1585 = vmatprep.subr.bf16.mxu0 0
        %1586 = vmatpush1.bf16.msra.mxu0 %v1557
        %1587 = vmatprep.subr.bf16.mxu0 0
        %1588 = vmatpush1.bf16.msra.mxu0 %v1558
        %1589 = vmatprep.subr.bf16.mxu0 0
        %1590 = vmatpush1.bf16.msra.mxu0 0
        %1591 = vmatprep.subr.bf16.mxu0 0
        %1592 = vmatpush1.bf16.msra.mxu0 0
        %1593 = vmatprep.subr.bf16.mxu0 0
        %1594 = vmatpush1.bf16.msra.mxu0 0
        %1595 = vmatprep.subr.bf16.mxu0 0
        %1596 = vmatpush1.bf16.msra.mxu0 0
        %1597 = vmatprep.subr.bf16.mxu0 0
        %1598 = vmatpush1.bf16.msra.mxu0 0
        %1599 = vmatprep.subr.bf16.mxu0 0
        %1600 = vmatpush1.bf16.msra.mxu0 0
        %1601 = vmatprep.subr.bf16.mxu0 0
        %1602 = vmatpush1.bf16.msra.mxu0 0
        %1603 = vmatprep.subr.bf16.mxu0 0
        %1604 = vmatpush1.bf16.msra.mxu0 0
        %1605 = vmatprep.subr.bf16.mxu0 0
        %1606 = vmatpush1.bf16.msra.mxu0 0
        %1607 = vmatprep.subr.bf16.mxu0 0
        %1608 = vmatpush1.bf16.msra.mxu0 0
        %1609 = vmatprep.subr.bf16.mxu0 0
        %1610 = vmatpush1.bf16.msra.mxu0 0
        %1611 = vmatprep.subr.bf16.mxu0 0
        %1612 = vmatpush1.bf16.msra.mxu0 0
        %1613 = vmatprep.subr.bf16.mxu0 0
        %1614 = vmatpush1.bf16.msra.mxu0 0
        %1615 = vmatprep.subr.bf16.mxu0 0
        %1616 = vmatpush1.bf16.msra.mxu0 0
        %1617 = vmatprep.mubr.bf16.mxu0 0
        %1618 = vmatmul.mubr.bf16.gmra.mrb[0].mxu0 %v1562
        %v1619 = vpop.f32.mrb[0].mxu0
        %v1620 = vadd.f32 0.0, %v1619
        %v1621 = vpop.f32.mrb[0].mxu0
        %v1622 = vpop.f32.mrb[0].mxu0
        %v1623 = vadd.f32 0.0, %v1622
        %v1624 = vpop.f32.mrb[0].mxu0
        %1625 = vmatprep.mubr.bf16.mxu0 0
        %1626 = vmatmul.mubr.bf16.gmra.mrb[0].mxu0 %v1565
        %v1627 = vpop.f32.mrb[0].mxu0
        %v1628 = vadd.f32 0.0, %v1627
        %v1629 = vpop.f32.mrb[0].mxu0
        %v1630 = vpop.f32.mrb[0].mxu0
        %v1631 = vadd.f32 0.0, %v1630
        %v1632 = vpop.f32.mrb[0].mxu0
        %1633 = vmatprep.mubr.bf16.mxu0 0
        %1634 = vmatmul.mubr.bf16.gmra.mrb[0].mxu0 %v1568
        %v1635 = vpop.f32.mrb[0].mxu0
        %v1636 = vadd.f32 0.0, %v1635
        %v1637 = vpop.f32.mrb[0].mxu0
        %v1638 = vpop.f32.mrb[0].mxu0
        %v1639 = vadd.f32 0.0, %v1638
        %v1640 = vpop.f32.mrb[0].mxu0
        %1641 = vmatprep.mubr.bf16.mxu0 0
        %1642 = vmatmul.mubr.bf16.gmra.mrb[0].mxu0 %v1571
        %v1643 = vpop.f32.mrb[0].mxu0
        %v1644 = vadd.f32 0.0, %v1643
        %v1645 = vpop.f32.mrb[0].mxu0
        %v1646 = vpop.f32.mrb[0].mxu0
        %v1647 = vadd.f32 0.0, %v1646
        %v1648 = vpop.f32.mrb[0].mxu0
        %1649 = vmatprep.mubr.bf16.mxu0 0
        %1650 = vmatmul.mubr.bf16.gmra.mrb[0].mxu0 %v1574
        %v1651 = vpop.f32.mrb[0].mxu0
        %v1652 = vadd.f32 0.0, %v1651
        %v1653 = vpop.f32.mrb[0].mxu0
        %v1654 = vpop.f32.mrb[0].mxu0
        %v1655 = vadd.f32 0.0, %v1654
        %v1656 = vpop.f32.mrb[0].mxu0
        %1657 = vmatprep.mubr.bf16.mxu0 0
        %1658 = vmatmul.mubr.bf16.gmra.mrb[0].mxu0 %v1577
        %v1659 = vpop.f32.mrb[0].mxu0
        %v1660 = vadd.f32 0.0, %v1659
        %v1661 = vpop.f32.mrb[0].mxu0
        %v1662 = vpop.f32.mrb[0].mxu0
        %v1663 = vadd.f32 0.0, %v1662
        %v1664 = vpop.f32.mrb[0].mxu0
        %1665 = vmatprep.mubr.bf16.mxu0 0
        %1666 = vmatmul.mubr.bf16.gmra.mrb[0].mxu0 %v1580
        %v1667 = vpop.f32.mrb[0].mxu0
        %v1668 = vadd.f32 0.0, %v1667
        %v1669 = vpop.f32.mrb[0].mxu0
        %v1670 = vpop.f32.mrb[0].mxu0
        %v1671 = vadd.f32 0.0, %v1670
        %v1672 = vpop.f32.mrb[0].mxu0
        %1673 = vmatprep.mubr.bf16.mxu0 0
        %1674 = vmatmul.mubr.bf16.gmra.mrb[0].mxu0 %v1583
        %v1675 = vpop.f32.mrb[0].mxu0
        %v1676 = vadd.f32 0.0, %v1675
        %v1677 = vpop.f32.mrb[0].mxu0
        %v1678 = vpop.f32.mrb[0].mxu0
        %v1679 = vadd.f32 0.0, %v1678
        %v1680 = vpop.f32.mrb[0].mxu0
        %1681 = vdwg.mxu0
        %v1682 = vadd.f32 %v1312, %v1620
        %v1683 = vadd.f32 %v1313, %v1623
        %v1684 = vadd.f32 %v1314, %v1628
        %v1685 = vadd.f32 %v1315, %v1631
        %v1686 = vadd.f32 %v1316, %v1636
        %v1687 = vadd.f32 %v1317, %v1639
        %v1688 = vadd.f32 %v1318, %v1644
        %v1689 = vadd.f32 %v1319, %v1647
        %v1690 = vadd.f32 %v1320, %v1652
        %v1691 = vadd.f32 %v1321, %v1655
        %v1692 = vadd.f32 %v1322, %v1660
        %v1693 = vadd.f32 %v1323, %v1663
        %v1694 = vadd.f32 %v1324, %v1668
        %v1695 = vadd.f32 %v1325, %v1671
        %v1696 = vadd.f32 %v1326, %v1676
        %v1697 = vadd.f32 %v1327, %v1679
        %v1706 = vrot.slane %v1110, 5
        %v1707 = vrot.slane %v1706, 4
        %v1708 = vrot.slane %v1111, 5
        %v1709 = vsel %vm874, %v1707, %v1708
        %v1710 = vrot.slane %v1708, 4
        %v1711 = vrot.slane %v1112, 5
        %v1712 = vsel %vm874, %v1710, %v1711
        %v1713 = vrot.slane %v1113, 5
        %v1714 = vrot.slane %v1713, 4
        %v1715 = vrot.slane %v1114, 5
        %v1716 = vsel %vm874, %v1714, %v1715
        %v1717 = vrot.slane %v1715, 4
        %v1718 = vrot.slane %v1115, 5
        %v1719 = vsel %vm874, %v1717, %v1718
        %v1720 = vrot.slane %v1116, 5
        %v1721 = vrot.slane %v1720, 4
        %v1722 = vrot.slane %v1117, 5
        %v1723 = vsel %vm874, %v1721, %v1722
        %v1724 = vrot.slane %v1722, 4
        %v1725 = vrot.slane %v1118, 5
        %v1726 = vsel %vm874, %v1724, %v1725
        %v1727 = vrot.slane %v1119, 5
        %v1728 = vrot.slane %v1727, 4
        %v1729 = vrot.slane %v1120, 5
        %v1730 = vsel %vm874, %v1728, %v1729
        %v1731 = vrot.slane %v1729, 4
        %v1732 = vrot.slane %v1121, 5
        %v1733 = vsel %vm874, %v1731, %v1732
        %v1734 = vrot.slane %v1122, 5
        %v1735 = vrot.slane %v1734, 4
        %v1736 = vrot.slane %v1123, 5
        %v1737 = vsel %vm874, %v1735, %v1736
        %v1738 = vrot.slane %v1736, 4
        %v1739 = vrot.slane %v1124, 5
        %v1740 = vsel %vm874, %v1738, %v1739
        %v1741 = vrot.slane %v1125, 5
        %v1742 = vrot.slane %v1741, 4
        %v1743 = vrot.slane %v1126, 5
        %v1744 = vsel %vm874, %v1742, %v1743
        %v1745 = vrot.slane %v1743, 4
        %v1746 = vrot.slane %v1127, 5
        %v1747 = vsel %vm874, %v1745, %v1746
        %v1748 = vrot.slane %v1128, 5
        %v1749 = vrot.slane %v1748, 4
        %v1750 = vrot.slane %v1129, 5
        %v1751 = vsel %vm874, %v1749, %v1750
        %v1752 = vrot.slane %v1750, 4
        %v1753 = vrot.slane %v1130, 5
        %v1754 = vsel %vm874, %v1752, %v1753
        %v1755 = vrot.slane %v1131, 5
        %v1756 = vrot.slane %v1755, 4
        %v1757 = vrot.slane %v1132, 5
        %v1758 = vsel %vm874, %v1756, %v1757
        %v1759 = vrot.slane %v1757, 4
        %v1760 = vrot.slane %v1133, 5
        %v1761 = vsel %vm874, %v1759, %v1760
        %s1762 = scalar_lea.vmem [#allocation5], 80
        %v1763 = vld [vmem:[%s1762] sm:$0xf]
        %v1764 = vld [vmem:[%s1762 + $0x4] sm:$0xf]
        %v1765 = vld [vmem:[%s1762 + $0x8] sm:$0xf]
        %v1766 = vld [vmem:[%s1762 + $0xc] sm:$0xf]
        %v1767 = vunpack.c.l.b16 %v1709
        %v1768 = vunpack.c.l.b16 %v1712
        %v1769 = vunpack.c.l.b16 %v1716
        %v1770 = vunpack.c.l.b16 %v1719
        %v1771 = vunpack.c.l.b16 %v1723
        %v1772 = vunpack.c.l.b16 %v1726
        %v1773 = vunpack.c.l.b16 %v1730
        %v1774 = vunpack.c.l.b16 %v1733
        %v1775 = vunpack.c.l.b16 %v1737
        %v1776 = vunpack.c.l.b16 %v1740
        %v1777 = vunpack.c.l.b16 %v1744
        %v1778 = vunpack.c.l.b16 %v1747
        %v1779 = vunpack.c.l.b16 %v1751
        %v1780 = vunpack.c.l.b16 %v1754
        %v1781 = vunpack.c.l.b16 %v1758
        %v1782 = vunpack.c.l.b16 %v1761
        %v1783 = vpack.c.b16 %v1768, %v1767
        %v1784 = vpack.c.b16 %v1770, %v1769
        %v1785 = vpack.c.b16 %v1772, %v1771
        %v1786 = vpack.c.b16 %v1774, %v1773
        %v1787 = vpack.c.b16 %v1776, %v1775
        %v1788 = vpack.c.b16 %v1778, %v1777
        %v1789 = vpack.c.b16 %v1780, %v1779
        %v1790 = vpack.c.b16 %v1782, %v1781
        %v1795 = vunpack.c.l.b16 %v1763
        %v1796 = vunpack.c.l.b16 %v1764
        %v1797 = vunpack.c.l.b16 %v1765
        %v1798 = vunpack.c.l.b16 %v1766
        %v1799 = vpack.c.b16 %v1796, %v1795
        %v1800 = vpack.c.b16 %v1798, %v1797
        %v1804 = vsel %vm569, %v1783, 0
        %v1807 = vsel %vm569, %v1784, 0
        %v1810 = vsel %vm569, %v1785, 0
        %v1813 = vsel %vm569, %v1786, 0
        %v1816 = vsel %vm569, %v1787, 0
        %v1819 = vsel %vm569, %v1788, 0
        %v1822 = vsel %vm569, %v1789, 0
        %v1825 = vsel %vm569, %v1790, 0
        %1827 = vmatprep.subr.bf16.mxu0 0
        %1828 = vmatpush1.bf16.msra.mxu0 %v1799
        %1829 = vmatprep.subr.bf16.mxu0 0
        %1830 = vmatpush1.bf16.msra.mxu0 %v1800
        %1831 = vmatprep.subr.bf16.mxu0 0
        %1832 = vmatpush1.bf16.msra.mxu0 0
        %1833 = vmatprep.subr.bf16.mxu0 0
        %1834 = vmatpush1.bf16.msra.mxu0 0
        %1835 = vmatprep.subr.bf16.mxu0 0
        %1836 = vmatpush1.bf16.msra.mxu0 0
        %1837 = vmatprep.subr.bf16.mxu0 0
        %1838 = vmatpush1.bf16.msra.mxu0 0
        %1839 = vmatprep.subr.bf16.mxu0 0
        %1840 = vmatpush1.bf16.msra.mxu0 0
        %1841 = vmatprep.subr.bf16.mxu0 0
        %1842 = vmatpush1.bf16.msra.mxu0 0
        %1843 = vmatprep.subr.bf16.mxu0 0
        %1844 = vmatpush1.bf16.msra.mxu0 0
        %1845 = vmatprep.subr.bf16.mxu0 0
        %1846 = vmatpush1.bf16.msra.mxu0 0
        %1847 = vmatprep.subr.bf16.mxu0 0
        %1848 = vmatpush1.bf16.msra.mxu0 0
        %1849 = vmatprep.subr.bf16.mxu0 0
        %1850 = vmatpush1.bf16.msra.mxu0 0
        %1851 = vmatprep.subr.bf16.mxu0 0
        %1852 = vmatpush1.bf16.msra.mxu0 0
        %1853 = vmatprep.subr.bf16.mxu0 0
        %1854 = vmatpush1.bf16.msra.mxu0 0
        %1855 = vmatprep.subr.bf16.mxu0 0
        %1856 = vmatpush1.bf16.msra.mxu0 0
        %1857 = vmatprep.subr.bf16.mxu0 0
        %1858 = vmatpush1.bf16.msra.mxu0 0
        %1859 = vmatprep.mubr.bf16.mxu0 0
        %1860 = vmatmul.mubr.bf16.gmra.mrb[0].mxu0 %v1804
        %v1861 = vpop.f32.mrb[0].mxu0
        %v1862 = vadd.f32 0.0, %v1861
        %v1863 = vpop.f32.mrb[0].mxu0
        %v1864 = vpop.f32.mrb[0].mxu0
        %v1865 = vadd.f32 0.0, %v1864
        %v1866 = vpop.f32.mrb[0].mxu0
        %1867 = vmatprep.mubr.bf16.mxu0 0
        %1868 = vmatmul.mubr.bf16.gmra.mrb[0].mxu0 %v1807
        %v1869 = vpop.f32.mrb[0].mxu0
        %v1870 = vadd.f32 0.0, %v1869
        %v1871 = vpop.f32.mrb[0].mxu0
        %v1872 = vpop.f32.mrb[0].mxu0
        %v1873 = vadd.f32 0.0, %v1872
        %v1874 = vpop.f32.mrb[0].mxu0
        %1875 = vmatprep.mubr.bf16.mxu0 0
        %1876 = vmatmul.mubr.bf16.gmra.mrb[0].mxu0 %v1810
        %v1877 = vpop.f32.mrb[0].mxu0
        %v1878 = vadd.f32 0.0, %v1877
        %v1879 = vpop.f32.mrb[0].mxu0
        %v1880 = vpop.f32.mrb[0].mxu0
        %v1881 = vadd.f32 0.0, %v1880
        %v1882 = vpop.f32.mrb[0].mxu0
        %1883 = vmatprep.mubr.bf16.mxu0 0
        %1884 = vmatmul.mubr.bf16.gmra.mrb[0].mxu0 %v1813
        %v1885 = vpop.f32.mrb[0].mxu0
        %v1886 = vadd.f32 0.0, %v1885
        %v1887 = vpop.f32.mrb[0].mxu0
        %v1888 = vpop.f32.mrb[0].mxu0
        %v1889 = vadd.f32 0.0, %v1888
        %v1890 = vpop.f32.mrb[0].mxu0
        %1891 = vmatprep.mubr.bf16.mxu0 0
        %1892 = vmatmul.mubr.bf16.gmra.mrb[0].mxu0 %v1816
        %v1893 = vpop.f32.mrb[0].mxu0
        %v1894 = vadd.f32 0.0, %v1893
        %v1895 = vpop.f32.mrb[0].mxu0
        %v1896 = vpop.f32.mrb[0].mxu0
        %v1897 = vadd.f32 0.0, %v1896
        %v1898 = vpop.f32.mrb[0].mxu0
        %1899 = vmatprep.mubr.bf16.mxu0 0
        %1900 = vmatmul.mubr.bf16.gmra.mrb[0].mxu0 %v1819
        %v1901 = vpop.f32.mrb[0].mxu0
        %v1902 = vadd.f32 0.0, %v1901
        %v1903 = vpop.f32.mrb[0].mxu0
        %v1904 = vpop.f32.mrb[0].mxu0
        %v1905 = vadd.f32 0.0, %v1904
        %v1906 = vpop.f32.mrb[0].mxu0
        %1907 = vmatprep.mubr.bf16.mxu0 0
        %1908 = vmatmul.mubr.bf16.gmra.mrb[0].mxu0 %v1822
        %v1909 = vpop.f32.mrb[0].mxu0
        %v1910 = vadd.f32 0.0, %v1909
        %v1911 = vpop.f32.mrb[0].mxu0
        %v1912 = vpop.f32.mrb[0].mxu0
        %v1913 = vadd.f32 0.0, %v1912
        %v1914 = vpop.f32.mrb[0].mxu0
        %1915 = vmatprep.mubr.bf16.mxu0 0
        %1916 = vmatmul.mubr.bf16.gmra.mrb[0].mxu0 %v1825
        %v1917 = vpop.f32.mrb[0].mxu0
        %v1918 = vadd.f32 0.0, %v1917
        %v1919 = vpop.f32.mrb[0].mxu0
        %v1920 = vpop.f32.mrb[0].mxu0
        %v1921 = vadd.f32 0.0, %v1920
        %v1922 = vpop.f32.mrb[0].mxu0
        %1923 = vdwg.mxu0
        %v1924 = vadd.f32 %v1682, %v1862
        %v1925 = vadd.f32 %v1683, %v1865
        %v1926 = vadd.f32 %v1684, %v1870
        %v1927 = vadd.f32 %v1685, %v1873
        %v1928 = vadd.f32 %v1686, %v1878
        %v1929 = vadd.f32 %v1687, %v1881
        %v1930 = vadd.f32 %v1688, %v1886
        %v1931 = vadd.f32 %v1689, %v1889
        %v1932 = vadd.f32 %v1690, %v1894
        %v1933 = vadd.f32 %v1691, %v1897
        %v1934 = vadd.f32 %v1692, %v1902
        %v1935 = vadd.f32 %v1693, %v1905
        %v1936 = vadd.f32 %v1694, %v1910
        %v1937 = vadd.f32 %v1695, %v1913
        %v1938 = vadd.f32 %v1696, %v1918
        %v1939 = vadd.f32 %v1697, %v1921
        %s1940 = scalar_lea.vmem %s265, 192 [#allocation2]
        %v1941 = vld [vmem:[%s1940] sm:$0xf]
        %v1942 = vld [vmem:[%s1940 + $0x4] sm:$0xf]
        %v1943 = vld [vmem:[%s1940 + $0x8] sm:$0x1]
        %v1944 = vld [vmem:[%s1940 + $0xc] sm:$0xf]
        %v1945 = vld [vmem:[%s1940 + $0x10] sm:$0xf]
        %v1946 = vld [vmem:[%s1940 + $0x14] sm:$0x1]
        %v1947 = vld [vmem:[%s1940 + $0x18] sm:$0xf]
        %v1948 = vld [vmem:[%s1940 + $0x1c] sm:$0xf]
        %v1949 = vld [vmem:[%s1940 + $0x20] sm:$0x1]
        %v1950 = vld [vmem:[%s1940 + $0x24] sm:$0xf]
        %v1951 = vld [vmem:[%s1940 + $0x28] sm:$0xf]
        %v1952 = vld [vmem:[%s1940 + $0x2c] sm:$0x1]
        %v1953 = vld [vmem:[%s1940 + $0x30] sm:$0xf]
        %v1954 = vld [vmem:[%s1940 + $0x34] sm:$0xf]
        %v1955 = vld [vmem:[%s1940 + $0x38] sm:$0x1]
        %v1956 = vld [vmem:[%s1940 + $0x3c] sm:$0xf]
        %v1957 = vld [vmem:[%s1940 + $0x40] sm:$0xf]
        %v1958 = vld [vmem:[%s1940 + $0x44] sm:$0x1]
        %v1959 = vld [vmem:[%s1940 + $0x48] sm:$0xf]
        %v1960 = vld [vmem:[%s1940 + $0x4c] sm:$0xf]
        %v1961 = vld [vmem:[%s1940 + $0x50] sm:$0x1]
        %v1962 = vld [vmem:[%s1940 + $0x54] sm:$0xf]
        %v1963 = vld [vmem:[%s1940 + $0x58] sm:$0xf]
        %v1964 = vld [vmem:[%s1940 + $0x5c] sm:$0x1]
        %s1965 = scalar_lea.vmem [#allocation5], 96
        %v1966 = vld [vmem:[%s1965] sm:$0xf]
        %v1967 = vld [vmem:[%s1965 + $0x4] sm:$0xf]
        %v1968 = vld [vmem:[%s1965 + $0x8] sm:$0xf]
        %v1969 = vld [vmem:[%s1965 + $0xc] sm:$0xf]
        %v1986 = vunpack.c.l.b16 %v1941
        %v1987 = vunpack.c.l.b16 %v1942
        %v1988 = vunpack.c.l.b16 %v1944
        %v1989 = vunpack.c.l.b16 %v1945
        %v1990 = vunpack.c.l.b16 %v1947
        %v1991 = vunpack.c.l.b16 %v1948
        %v1992 = vunpack.c.l.b16 %v1950
        %v1993 = vunpack.c.l.b16 %v1951
        %v1994 = vunpack.c.l.b16 %v1953
        %v1995 = vunpack.c.l.b16 %v1954
        %v1996 = vunpack.c.l.b16 %v1956
        %v1997 = vunpack.c.l.b16 %v1957
        %v1998 = vunpack.c.l.b16 %v1959
        %v1999 = vunpack.c.l.b16 %v1960
        %v2000 = vunpack.c.l.b16 %v1962
        %v2001 = vunpack.c.l.b16 %v1963
        %v2002 = vpack.c.b16 %v1987, %v1986
        %v2003 = vpack.c.b16 %v1989, %v1988
        %v2004 = vpack.c.b16 %v1991, %v1990
        %v2005 = vpack.c.b16 %v1993, %v1992
        %v2006 = vpack.c.b16 %v1995, %v1994
        %v2007 = vpack.c.b16 %v1997, %v1996
        %v2008 = vpack.c.b16 %v1999, %v1998
        %v2009 = vpack.c.b16 %v2001, %v2000
        %v2014 = vunpack.c.l.b16 %v1966
        %v2015 = vunpack.c.l.b16 %v1967
        %v2016 = vunpack.c.l.b16 %v1968
        %v2017 = vunpack.c.l.b16 %v1969
        %v2018 = vpack.c.b16 %v2015, %v2014
        %v2019 = vpack.c.b16 %v2017, %v2016
        %v2023 = vsel %vm569, %v2002, 0
        %v2026 = vsel %vm569, %v2003, 0
        %v2029 = vsel %vm569, %v2004, 0
        %v2032 = vsel %vm569, %v2005, 0
        %v2035 = vsel %vm569, %v2006, 0
        %v2038 = vsel %vm569, %v2007, 0
        %v2041 = vsel %vm569, %v2008, 0
        %v2044 = vsel %vm569, %v2009, 0
        %2046 = vmatprep.subr.bf16.mxu0 0
        %2047 = vmatpush1.bf16.msra.mxu0 %v2018
        %2048 = vmatprep.subr.bf16.mxu0 0
        %2049 = vmatpush1.bf16.msra.mxu0 %v2019
        %2050 = vmatprep.subr.bf16.mxu0 0
        %2051 = vmatpush1.bf16.msra.mxu0 0
        %2052 = vmatprep.subr.bf16.mxu0 0
        %2053 = vmatpush1.bf16.msra.mxu0 0
        %2054 = vmatprep.subr.bf16.mxu0 0
        %2055 = vmatpush1.bf16.msra.mxu0 0
        %2056 = vmatprep.subr.bf16.mxu0 0
        %2057 = vmatpush1.bf16.msra.mxu0 0
        %2058 = vmatprep.subr.bf16.mxu0 0
        %2059 = vmatpush1.bf16.msra.mxu0 0
        %2060 = vmatprep.subr.bf16.mxu0 0
        %2061 = vmatpush1.bf16.msra.mxu0 0
        %2062 = vmatprep.subr.bf16.mxu0 0
        %2063 = vmatpush1.bf16.msra.mxu0 0
        %2064 = vmatprep.subr.bf16.mxu0 0
        %2065 = vmatpush1.bf16.msra.mxu0 0
        %2066 = vmatprep.subr.bf16.mxu0 0
        %2067 = vmatpush1.bf16.msra.mxu0 0
        %2068 = vmatprep.subr.bf16.mxu0 0
        %2069 = vmatpush1.bf16.msra.mxu0 0
        %2070 = vmatprep.subr.bf16.mxu0 0
        %2071 = vmatpush1.bf16.msra.mxu0 0
        %2072 = vmatprep.subr.bf16.mxu0 0
        %2073 = vmatpush1.bf16.msra.mxu0 0
        %2074 = vmatprep.subr.bf16.mxu0 0
        %2075 = vmatpush1.bf16.msra.mxu0 0
        %2076 = vmatprep.subr.bf16.mxu0 0
        %2077 = vmatpush1.bf16.msra.mxu0 0
        %2078 = vmatprep.mubr.bf16.mxu0 0
        %2079 = vmatmul.mubr.bf16.gmra.mrb[0].mxu0 %v2023
        %v2080 = vpop.f32.mrb[0].mxu0
        %v2081 = vadd.f32 0.0, %v2080
        %v2082 = vpop.f32.mrb[0].mxu0
        %v2083 = vpop.f32.mrb[0].mxu0
        %v2084 = vadd.f32 0.0, %v2083
        %v2085 = vpop.f32.mrb[0].mxu0
        %2086 = vmatprep.mubr.bf16.mxu0 0
        %2087 = vmatmul.mubr.bf16.gmra.mrb[0].mxu0 %v2026
        %v2088 = vpop.f32.mrb[0].mxu0
        %v2089 = vadd.f32 0.0, %v2088
        %v2090 = vpop.f32.mrb[0].mxu0
        %v2091 = vpop.f32.mrb[0].mxu0
        %v2092 = vadd.f32 0.0, %v2091
        %v2093 = vpop.f32.mrb[0].mxu0
        %2094 = vmatprep.mubr.bf16.mxu0 0
        %2095 = vmatmul.mubr.bf16.gmra.mrb[0].mxu0 %v2029
        %v2096 = vpop.f32.mrb[0].mxu0
        %v2097 = vadd.f32 0.0, %v2096
        %v2098 = vpop.f32.mrb[0].mxu0
        %v2099 = vpop.f32.mrb[0].mxu0
        %v2100 = vadd.f32 0.0, %v2099
        %v2101 = vpop.f32.mrb[0].mxu0
        %2102 = vmatprep.mubr.bf16.mxu0 0
        %2103 = vmatmul.mubr.bf16.gmra.mrb[0].mxu0 %v2032
        %v2104 = vpop.f32.mrb[0].mxu0
        %v2105 = vadd.f32 0.0, %v2104
        %v2106 = vpop.f32.mrb[0].mxu0
        %v2107 = vpop.f32.mrb[0].mxu0
        %v2108 = vadd.f32 0.0, %v2107
        %v2109 = vpop.f32.mrb[0].mxu0
        %2110 = vmatprep.mubr.bf16.mxu0 0
        %2111 = vmatmul.mubr.bf16.gmra.mrb[0].mxu0 %v2035
        %v2112 = vpop.f32.mrb[0].mxu0
        %v2113 = vadd.f32 0.0, %v2112
        %v2114 = vpop.f32.mrb[0].mxu0
        %v2115 = vpop.f32.mrb[0].mxu0
        %v2116 = vadd.f32 0.0, %v2115
        %v2117 = vpop.f32.mrb[0].mxu0
        %2118 = vmatprep.mubr.bf16.mxu0 0
        %2119 = vmatmul.mubr.bf16.gmra.mrb[0].mxu0 %v2038
        %v2120 = vpop.f32.mrb[0].mxu0
        %v2121 = vadd.f32 0.0, %v2120
        %v2122 = vpop.f32.mrb[0].mxu0
        %v2123 = vpop.f32.mrb[0].mxu0
        %v2124 = vadd.f32 0.0, %v2123
        %v2125 = vpop.f32.mrb[0].mxu0
        %2126 = vmatprep.mubr.bf16.mxu0 0
        %2127 = vmatmul.mubr.bf16.gmra.mrb[0].mxu0 %v2041
        %v2128 = vpop.f32.mrb[0].mxu0
        %v2129 = vadd.f32 0.0, %v2128
        %v2130 = vpop.f32.mrb[0].mxu0
        %v2131 = vpop.f32.mrb[0].mxu0
        %v2132 = vadd.f32 0.0, %v2131
        %v2133 = vpop.f32.mrb[0].mxu0
        %2134 = vmatprep.mubr.bf16.mxu0 0
        %2135 = vmatmul.mubr.bf16.gmra.mrb[0].mxu0 %v2044
        %v2136 = vpop.f32.mrb[0].mxu0
        %v2137 = vadd.f32 0.0, %v2136
        %v2138 = vpop.f32.mrb[0].mxu0
        %v2139 = vpop.f32.mrb[0].mxu0
        %v2140 = vadd.f32 0.0, %v2139
        %v2141 = vpop.f32.mrb[0].mxu0
        %2142 = vdwg.mxu0
        %v2143 = vadd.f32 %v1924, %v2081
        %v2144 = vadd.f32 %v1925, %v2084
        %v2145 = vadd.f32 %v1926, %v2089
        %v2146 = vadd.f32 %v1927, %v2092
        %v2147 = vadd.f32 %v1928, %v2097
        %v2148 = vadd.f32 %v1929, %v2100
        %v2149 = vadd.f32 %v1930, %v2105
        %v2150 = vadd.f32 %v1931, %v2108
        %v2151 = vadd.f32 %v1932, %v2113
        %v2152 = vadd.f32 %v1933, %v2116
        %v2153 = vadd.f32 %v1934, %v2121
        %v2154 = vadd.f32 %v1935, %v2124
        %v2155 = vadd.f32 %v1936, %v2129
        %v2156 = vadd.f32 %v1937, %v2132
        %v2157 = vadd.f32 %v1938, %v2137
        %v2158 = vadd.f32 %v1939, %v2140
        %v2160 = vshrl.u32 %v1941, 16
        %v2162 = vrot.slane %v2160, 4
        %v2163 = vshll.u32 %v1941, 16
        %v2165 = vrot.slane %v2163, 5
        %v2166 = vor.u32 %v2162, %v2165
        %v2167 = vrot.slane %v2166, 4
        %v2169 = vshll.u32 %v1942, 16
        %v2171 = vrot.slane %v2169, 5
        %v2172 = vsel %vm335, %v2167, %v2171
        %v2173 = vshrl.u32 %v1942, 16
        %v2175 = vrot.slane %v2173, 4
        %v2176 = vor.u32 %v2175, %v2171
        %v2177 = vrot.slane %v2176, 4
        %v2179 = vshll.u32 %v1943, 16
        %v2181 = vrot.slane %v2179, 5
        %v2182 = vsel %vm335, %v2177, %v2181
        %v2184 = vshrl.u32 %v1944, 16
        %v2186 = vrot.slane %v2184, 4
        %v2187 = vshll.u32 %v1944, 16
        %v2189 = vrot.slane %v2187, 5
        %v2190 = vor.u32 %v2186, %v2189
        %v2191 = vrot.slane %v2190, 4
        %v2193 = vshll.u32 %v1945, 16
        %v2195 = vrot.slane %v2193, 5
        %v2196 = vsel %vm335, %v2191, %v2195
        %v2197 = vshrl.u32 %v1945, 16
        %v2199 = vrot.slane %v2197, 4
        %v2200 = vor.u32 %v2199, %v2195
        %v2201 = vrot.slane %v2200, 4
        %v2203 = vshll.u32 %v1946, 16
        %v2205 = vrot.slane %v2203, 5
        %v2206 = vsel %vm335, %v2201, %v2205
        %v2208 = vshrl.u32 %v1947, 16
        %v2210 = vrot.slane %v2208, 4
        %v2211 = vshll.u32 %v1947, 16
        %v2213 = vrot.slane %v2211, 5
        %v2214 = vor.u32 %v2210, %v2213
        %v2215 = vrot.slane %v2214, 4
        %v2217 = vshll.u32 %v1948, 16
        %v2219 = vrot.slane %v2217, 5
        %v2220 = vsel %vm335, %v2215, %v2219
        %v2221 = vshrl.u32 %v1948, 16
        %v2223 = vrot.slane %v2221, 4
        %v2224 = vor.u32 %v2223, %v2219
        %v2225 = vrot.slane %v2224, 4
        %v2227 = vshll.u32 %v1949, 16
        %v2229 = vrot.slane %v2227, 5
        %v2230 = vsel %vm335, %v2225, %v2229
        %v2232 = vshrl.u32 %v1950, 16
        %v2234 = vrot.slane %v2232, 4
        %v2235 = vshll.u32 %v1950, 16
        %v2237 = vrot.slane %v2235, 5
        %v2238 = vor.u32 %v2234, %v2237
        %v2239 = vrot.slane %v2238, 4
        %v2241 = vshll.u32 %v1951, 16
        %v2243 = vrot.slane %v2241, 5
        %v2244 = vsel %vm335, %v2239, %v2243
        %v2245 = vshrl.u32 %v1951, 16
        %v2247 = vrot.slane %v2245, 4
        %v2248 = vor.u32 %v2247, %v2243
        %v2249 = vrot.slane %v2248, 4
        %v2251 = vshll.u32 %v1952, 16
        %v2253 = vrot.slane %v2251, 5
        %v2254 = vsel %vm335, %v2249, %v2253
        %v2256 = vshrl.u32 %v1953, 16
        %v2258 = vrot.slane %v2256, 4
        %v2259 = vshll.u32 %v1953, 16
        %v2261 = vrot.slane %v2259, 5
        %v2262 = vor.u32 %v2258, %v2261
        %v2263 = vrot.slane %v2262, 4
        %v2265 = vshll.u32 %v1954, 16
        %v2267 = vrot.slane %v2265, 5
        %v2268 = vsel %vm335, %v2263, %v2267
        %v2269 = vshrl.u32 %v1954, 16
        %v2271 = vrot.slane %v2269, 4
        %v2272 = vor.u32 %v2271, %v2267
        %v2273 = vrot.slane %v2272, 4
        %v2275 = vshll.u32 %v1955, 16
        %v2277 = vrot.slane %v2275, 5
        %v2278 = vsel %vm335, %v2273, %v2277
        %v2280 = vshrl.u32 %v1956, 16
        %v2282 = vrot.slane %v2280, 4
        %v2283 = vshll.u32 %v1956, 16
        %v2285 = vrot.slane %v2283, 5
        %v2286 = vor.u32 %v2282, %v2285
        %v2287 = vrot.slane %v2286, 4
        %v2289 = vshll.u32 %v1957, 16
        %v2291 = vrot.slane %v2289, 5
        %v2292 = vsel %vm335, %v2287, %v2291
        %v2293 = vshrl.u32 %v1957, 16
        %v2295 = vrot.slane %v2293, 4
        %v2296 = vor.u32 %v2295, %v2291
        %v2297 = vrot.slane %v2296, 4
        %v2299 = vshll.u32 %v1958, 16
        %v2301 = vrot.slane %v2299, 5
        %v2302 = vsel %vm335, %v2297, %v2301
        %v2304 = vshrl.u32 %v1959, 16
        %v2306 = vrot.slane %v2304, 4
        %v2307 = vshll.u32 %v1959, 16
        %v2309 = vrot.slane %v2307, 5
        %v2310 = vor.u32 %v2306, %v2309
        %v2311 = vrot.slane %v2310, 4
        %v2313 = vshll.u32 %v1960, 16
        %v2315 = vrot.slane %v2313, 5
        %v2316 = vsel %vm335, %v2311, %v2315
        %v2317 = vshrl.u32 %v1960, 16
        %v2319 = vrot.slane %v2317, 4
        %v2320 = vor.u32 %v2319, %v2315
        %v2321 = vrot.slane %v2320, 4
        %v2323 = vshll.u32 %v1961, 16
        %v2325 = vrot.slane %v2323, 5
        %v2326 = vsel %vm335, %v2321, %v2325
        %v2328 = vshrl.u32 %v1962, 16
        %v2330 = vrot.slane %v2328, 4
        %v2331 = vshll.u32 %v1962, 16
        %v2333 = vrot.slane %v2331, 5
        %v2334 = vor.u32 %v2330, %v2333
        %v2335 = vrot.slane %v2334, 4
        %v2337 = vshll.u32 %v1963, 16
        %v2339 = vrot.slane %v2337, 5
        %v2340 = vsel %vm335, %v2335, %v2339
        %v2341 = vshrl.u32 %v1963, 16
        %v2343 = vrot.slane %v2341, 4
        %v2344 = vor.u32 %v2343, %v2339
        %v2345 = vrot.slane %v2344, 4
        %v2347 = vshll.u32 %v1964, 16
        %v2349 = vrot.slane %v2347, 5
        %v2350 = vsel %vm335, %v2345, %v2349
        %s2351 = scalar_lea.vmem [#allocation5], 112
        %v2352 = vld [vmem:[%s2351] sm:$0xf]
        %v2353 = vld [vmem:[%s2351 + $0x4] sm:$0xf]
        %v2354 = vld [vmem:[%s2351 + $0x8] sm:$0xf]
        %v2355 = vld [vmem:[%s2351 + $0xc] sm:$0xf]
        %v2356 = vunpack.c.l.b16 %v2172
        %v2357 = vunpack.c.l.b16 %v2182
        %v2358 = vunpack.c.l.b16 %v2196
        %v2359 = vunpack.c.l.b16 %v2206
        %v2360 = vunpack.c.l.b16 %v2220
        %v2361 = vunpack.c.l.b16 %v2230
        %v2362 = vunpack.c.l.b16 %v2244
        %v2363 = vunpack.c.l.b16 %v2254
        %v2364 = vunpack.c.l.b16 %v2268
        %v2365 = vunpack.c.l.b16 %v2278
        %v2366 = vunpack.c.l.b16 %v2292
        %v2367 = vunpack.c.l.b16 %v2302
        %v2368 = vunpack.c.l.b16 %v2316
        %v2369 = vunpack.c.l.b16 %v2326
        %v2370 = vunpack.c.l.b16 %v2340
        %v2371 = vunpack.c.l.b16 %v2350
        %v2372 = vpack.c.b16 %v2357, %v2356
        %v2373 = vpack.c.b16 %v2359, %v2358
        %v2374 = vpack.c.b16 %v2361, %v2360
        %v2375 = vpack.c.b16 %v2363, %v2362
        %v2376 = vpack.c.b16 %v2365, %v2364
        %v2377 = vpack.c.b16 %v2367, %v2366
        %v2378 = vpack.c.b16 %v2369, %v2368
        %v2379 = vpack.c.b16 %v2371, %v2370
        %v2384 = vunpack.c.l.b16 %v2352
        %v2385 = vunpack.c.l.b16 %v2353
        %v2386 = vunpack.c.l.b16 %v2354
        %v2387 = vunpack.c.l.b16 %v2355
        %v2388 = vpack.c.b16 %v2385, %v2384
        %v2389 = vpack.c.b16 %v2387, %v2386
        %v2393 = vsel %vm569, %v2372, 0
        %v2396 = vsel %vm569, %v2373, 0
        %v2399 = vsel %vm569, %v2374, 0
        %v2402 = vsel %vm569, %v2375, 0
        %v2405 = vsel %vm569, %v2376, 0
        %v2408 = vsel %vm569, %v2377, 0
        %v2411 = vsel %vm569, %v2378, 0
        %v2414 = vsel %vm569, %v2379, 0
        %2416 = vmatprep.subr.bf16.mxu0 0
        %2417 = vmatpush1.bf16.msra.mxu0 %v2388
        %2418 = vmatprep.subr.bf16.mxu0 0
        %2419 = vmatpush1.bf16.msra.mxu0 %v2389
        %2420 = vmatprep.subr.bf16.mxu0 0
        %2421 = vmatpush1.bf16.msra.mxu0 0
        %2422 = vmatprep.subr.bf16.mxu0 0
        %2423 = vmatpush1.bf16.msra.mxu0 0
        %2424 = vmatprep.subr.bf16.mxu0 0
        %2425 = vmatpush1.bf16.msra.mxu0 0
        %2426 = vmatprep.subr.bf16.mxu0 0
        %2427 = vmatpush1.bf16.msra.mxu0 0
        %2428 = vmatprep.subr.bf16.mxu0 0
        %2429 = vmatpush1.bf16.msra.mxu0 0
        %2430 = vmatprep.subr.bf16.mxu0 0
        %2431 = vmatpush1.bf16.msra.mxu0 0
        %2432 = vmatprep.subr.bf16.mxu0 0
        %2433 = vmatpush1.bf16.msra.mxu0 0
        %2434 = vmatprep.subr.bf16.mxu0 0
        %2435 = vmatpush1.bf16.msra.mxu0 0
        %2436 = vmatprep.subr.bf16.mxu0 0
        %2437 = vmatpush1.bf16.msra.mxu0 0
        %2438 = vmatprep.subr.bf16.mxu0 0
        %2439 = vmatpush1.bf16.msra.mxu0 0
        %2440 = vmatprep.subr.bf16.mxu0 0
        %2441 = vmatpush1.bf16.msra.mxu0 0
        %2442 = vmatprep.subr.bf16.mxu0 0
        %2443 = vmatpush1.bf16.msra.mxu0 0
        %2444 = vmatprep.subr.bf16.mxu0 0
        %2445 = vmatpush1.bf16.msra.mxu0 0
        %2446 = vmatprep.subr.bf16.mxu0 0
        %2447 = vmatpush1.bf16.msra.mxu0 0
        %2448 = vmatprep.mubr.bf16.mxu0 0
        %2449 = vmatmul.mubr.bf16.gmra.mrb[0].mxu0 %v2393
        %v2450 = vpop.f32.mrb[0].mxu0
        %v2451 = vadd.f32 0.0, %v2450
        %v2452 = vpop.f32.mrb[0].mxu0
        %v2453 = vpop.f32.mrb[0].mxu0
        %v2454 = vadd.f32 0.0, %v2453
        %v2455 = vpop.f32.mrb[0].mxu0
        %2456 = vmatprep.mubr.bf16.mxu0 0
        %2457 = vmatmul.mubr.bf16.gmra.mrb[0].mxu0 %v2396
        %v2458 = vpop.f32.mrb[0].mxu0
        %v2459 = vadd.f32 0.0, %v2458
        %v2460 = vpop.f32.mrb[0].mxu0
        %v2461 = vpop.f32.mrb[0].mxu0
        %v2462 = vadd.f32 0.0, %v2461
        %v2463 = vpop.f32.mrb[0].mxu0
        %2464 = vmatprep.mubr.bf16.mxu0 0
        %2465 = vmatmul.mubr.bf16.gmra.mrb[0].mxu0 %v2399
        %v2466 = vpop.f32.mrb[0].mxu0
        %v2467 = vadd.f32 0.0, %v2466
        %v2468 = vpop.f32.mrb[0].mxu0
        %v2469 = vpop.f32.mrb[0].mxu0
        %v2470 = vadd.f32 0.0, %v2469
        %v2471 = vpop.f32.mrb[0].mxu0
        %2472 = vmatprep.mubr.bf16.mxu0 0
        %2473 = vmatmul.mubr.bf16.gmra.mrb[0].mxu0 %v2402
        %v2474 = vpop.f32.mrb[0].mxu0
        %v2475 = vadd.f32 0.0, %v2474
        %v2476 = vpop.f32.mrb[0].mxu0
        %v2477 = vpop.f32.mrb[0].mxu0
        %v2478 = vadd.f32 0.0, %v2477
        %v2479 = vpop.f32.mrb[0].mxu0
        %2480 = vmatprep.mubr.bf16.mxu0 0
        %2481 = vmatmul.mubr.bf16.gmra.mrb[0].mxu0 %v2405
        %v2482 = vpop.f32.mrb[0].mxu0
        %v2483 = vadd.f32 0.0, %v2482
        %v2484 = vpop.f32.mrb[0].mxu0
        %v2485 = vpop.f32.mrb[0].mxu0
        %v2486 = vadd.f32 0.0, %v2485
        %v2487 = vpop.f32.mrb[0].mxu0
        %2488 = vmatprep.mubr.bf16.mxu0 0
        %2489 = vmatmul.mubr.bf16.gmra.mrb[0].mxu0 %v2408
        %v2490 = vpop.f32.mrb[0].mxu0
        %v2491 = vadd.f32 0.0, %v2490
        %v2492 = vpop.f32.mrb[0].mxu0
        %v2493 = vpop.f32.mrb[0].mxu0
        %v2494 = vadd.f32 0.0, %v2493
        %v2495 = vpop.f32.mrb[0].mxu0
        %2496 = vmatprep.mubr.bf16.mxu0 0
        %2497 = vmatmul.mubr.bf16.gmra.mrb[0].mxu0 %v2411
        %v2498 = vpop.f32.mrb[0].mxu0
        %v2499 = vadd.f32 0.0, %v2498
        %v2500 = vpop.f32.mrb[0].mxu0
        %v2501 = vpop.f32.mrb[0].mxu0
        %v2502 = vadd.f32 0.0, %v2501
        %v2503 = vpop.f32.mrb[0].mxu0
        %2504 = vmatprep.mubr.bf16.mxu0 0
        %2505 = vmatmul.mubr.bf16.gmra.mrb[0].mxu0 %v2414
        %v2506 = vpop.f32.mrb[0].mxu0
        %v2507 = vadd.f32 0.0, %v2506
        %v2508 = vpop.f32.mrb[0].mxu0
        %v2509 = vpop.f32.mrb[0].mxu0
        %v2510 = vadd.f32 0.0, %v2509
        %v2511 = vpop.f32.mrb[0].mxu0
        %2512 = vdwg.mxu0
        %v2513 = vadd.f32 %v2143, %v2451
        %v2514 = vadd.f32 %v2144, %v2454
        %v2515 = vadd.f32 %v2145, %v2459
        %v2516 = vadd.f32 %v2146, %v2462
        %v2517 = vadd.f32 %v2147, %v2467
        %v2518 = vadd.f32 %v2148, %v2470
        %v2519 = vadd.f32 %v2149, %v2475
        %v2520 = vadd.f32 %v2150, %v2478
        %v2521 = vadd.f32 %v2151, %v2483
        %v2522 = vadd.f32 %v2152, %v2486
        %v2523 = vadd.f32 %v2153, %v2491
        %v2524 = vadd.f32 %v2154, %v2494
        %v2525 = vadd.f32 %v2155, %v2499
        %v2526 = vadd.f32 %v2156, %v2502
        %v2527 = vadd.f32 %v2157, %v2507
        %v2528 = vadd.f32 %v2158, %v2510
        %v2537 = vrot.slane %v1941, 5
        %v2538 = vrot.slane %v2537, 4
        %v2539 = vrot.slane %v1942, 5
        %v2540 = vsel %vm874, %v2538, %v2539
        %v2541 = vrot.slane %v2539, 4
        %v2542 = vrot.slane %v1943, 5
        %v2543 = vsel %vm874, %v2541, %v2542
        %v2544 = vrot.slane %v1944, 5
        %v2545 = vrot.slane %v2544, 4
        %v2546 = vrot.slane %v1945, 5
        %v2547 = vsel %vm874, %v2545, %v2546
        %v2548 = vrot.slane %v2546, 4
        %v2549 = vrot.slane %v1946, 5
        %v2550 = vsel %vm874, %v2548, %v2549
        %v2551 = vrot.slane %v1947, 5
        %v2552 = vrot.slane %v2551, 4
        %v2553 = vrot.slane %v1948, 5
        %v2554 = vsel %vm874, %v2552, %v2553
        %v2555 = vrot.slane %v2553, 4
        %v2556 = vrot.slane %v1949, 5
        %v2557 = vsel %vm874, %v2555, %v2556
        %v2558 = vrot.slane %v1950, 5
        %v2559 = vrot.slane %v2558, 4
        %v2560 = vrot.slane %v1951, 5
        %v2561 = vsel %vm874, %v2559, %v2560
        %v2562 = vrot.slane %v2560, 4
        %v2563 = vrot.slane %v1952, 5
        %v2564 = vsel %vm874, %v2562, %v2563
        %v2565 = vrot.slane %v1953, 5
        %v2566 = vrot.slane %v2565, 4
        %v2567 = vrot.slane %v1954, 5
        %v2568 = vsel %vm874, %v2566, %v2567
        %v2569 = vrot.slane %v2567, 4
        %v2570 = vrot.slane %v1955, 5
        %v2571 = vsel %vm874, %v2569, %v2570
        %v2572 = vrot.slane %v1956, 5
        %v2573 = vrot.slane %v2572, 4
        %v2574 = vrot.slane %v1957, 5
        %v2575 = vsel %vm874, %v2573, %v2574
        %v2576 = vrot.slane %v2574, 4
        %v2577 = vrot.slane %v1958, 5
        %v2578 = vsel %vm874, %v2576, %v2577
        %v2579 = vrot.slane %v1959, 5
        %v2580 = vrot.slane %v2579, 4
        %v2581 = vrot.slane %v1960, 5
        %v2582 = vsel %vm874, %v2580, %v2581
        %v2583 = vrot.slane %v2581, 4
        %v2584 = vrot.slane %v1961, 5
        %v2585 = vsel %vm874, %v2583, %v2584
        %v2586 = vrot.slane %v1962, 5
        %v2587 = vrot.slane %v2586, 4
        %v2588 = vrot.slane %v1963, 5
        %v2589 = vsel %vm874, %v2587, %v2588
        %v2590 = vrot.slane %v2588, 4
        %v2591 = vrot.slane %v1964, 5
        %v2592 = vsel %vm874, %v2590, %v2591
        %s2593 = scalar_lea.vmem [#allocation5], 128
        %v2594 = vld [vmem:[%s2593] sm:$0xf]
        %v2595 = vld [vmem:[%s2593 + $0x4] sm:$0xf]
        %v2596 = vld [vmem:[%s2593 + $0x8] sm:$0xf]
        %v2597 = vld [vmem:[%s2593 + $0xc] sm:$0xf]
        %v2598 = vunpack.c.l.b16 %v2540
        %v2599 = vunpack.c.l.b16 %v2543
        %v2600 = vunpack.c.l.b16 %v2547
        %v2601 = vunpack.c.l.b16 %v2550
        %v2602 = vunpack.c.l.b16 %v2554
        %v2603 = vunpack.c.l.b16 %v2557
        %v2604 = vunpack.c.l.b16 %v2561
        %v2605 = vunpack.c.l.b16 %v2564
        %v2606 = vunpack.c.l.b16 %v2568
        %v2607 = vunpack.c.l.b16 %v2571
        %v2608 = vunpack.c.l.b16 %v2575
        %v2609 = vunpack.c.l.b16 %v2578
        %v2610 = vunpack.c.l.b16 %v2582
        %v2611 = vunpack.c.l.b16 %v2585
        %v2612 = vunpack.c.l.b16 %v2589
        %v2613 = vunpack.c.l.b16 %v2592
        %v2614 = vpack.c.b16 %v2599, %v2598
        %v2615 = vpack.c.b16 %v2601, %v2600
        %v2616 = vpack.c.b16 %v2603, %v2602
        %v2617 = vpack.c.b16 %v2605, %v2604
        %v2618 = vpack.c.b16 %v2607, %v2606
        %v2619 = vpack.c.b16 %v2609, %v2608
        %v2620 = vpack.c.b16 %v2611, %v2610
        %v2621 = vpack.c.b16 %v2613, %v2612
        %v2626 = vunpack.c.l.b16 %v2594
        %v2627 = vunpack.c.l.b16 %v2595
        %v2628 = vunpack.c.l.b16 %v2596
        %v2629 = vunpack.c.l.b16 %v2597
        %v2630 = vpack.c.b16 %v2627, %v2626
        %v2631 = vpack.c.b16 %v2629, %v2628
        %v2635 = vsel %vm569, %v2614, 0
        %v2638 = vsel %vm569, %v2615, 0
        %v2641 = vsel %vm569, %v2616, 0
        %v2644 = vsel %vm569, %v2617, 0
        %v2647 = vsel %vm569, %v2618, 0
        %v2650 = vsel %vm569, %v2619, 0
        %v2653 = vsel %vm569, %v2620, 0
        %v2656 = vsel %vm569, %v2621, 0
        %2658 = vmatprep.subr.bf16.mxu0 0
        %2659 = vmatpush1.bf16.msra.mxu0 %v2630
        %2660 = vmatprep.subr.bf16.mxu0 0
        %2661 = vmatpush1.bf16.msra.mxu0 %v2631
        %2662 = vmatprep.subr.bf16.mxu0 0
        %2663 = vmatpush1.bf16.msra.mxu0 0
        %2664 = vmatprep.subr.bf16.mxu0 0
        %2665 = vmatpush1.bf16.msra.mxu0 0
        %2666 = vmatprep.subr.bf16.mxu0 0
        %2667 = vmatpush1.bf16.msra.mxu0 0
        %2668 = vmatprep.subr.bf16.mxu0 0
        %2669 = vmatpush1.bf16.msra.mxu0 0
        %2670 = vmatprep.subr.bf16.mxu0 0
        %2671 = vmatpush1.bf16.msra.mxu0 0
        %2672 = vmatprep.subr.bf16.mxu0 0
        %2673 = vmatpush1.bf16.msra.mxu0 0
        %2674 = vmatprep.subr.bf16.mxu0 0
        %2675 = vmatpush1.bf16.msra.mxu0 0
        %2676 = vmatprep.subr.bf16.mxu0 0
        %2677 = vmatpush1.bf16.msra.mxu0 0
        %2678 = vmatprep.subr.bf16.mxu0 0
        %2679 = vmatpush1.bf16.msra.mxu0 0
        %2680 = vmatprep.subr.bf16.mxu0 0
        %2681 = vmatpush1.bf16.msra.mxu0 0
        %2682 = vmatprep.subr.bf16.mxu0 0
        %2683 = vmatpush1.bf16.msra.mxu0 0
        %2684 = vmatprep.subr.bf16.mxu0 0
        %2685 = vmatpush1.bf16.msra.mxu0 0
        %2686 = vmatprep.subr.bf16.mxu0 0
        %2687 = vmatpush1.bf16.msra.mxu0 0
        %2688 = vmatprep.subr.bf16.mxu0 0
        %2689 = vmatpush1.bf16.msra.mxu0 0
        %2690 = vmatprep.mubr.bf16.mxu0 0
        %2691 = vmatmul.mubr.bf16.gmra.mrb[0].mxu0 %v2635
        %v2692 = vpop.f32.mrb[0].mxu0
        %v2693 = vadd.f32 0.0, %v2692
        %v2694 = vpop.f32.mrb[0].mxu0
        %v2695 = vpop.f32.mrb[0].mxu0
        %v2696 = vadd.f32 0.0, %v2695
        %v2697 = vpop.f32.mrb[0].mxu0
        %2698 = vmatprep.mubr.bf16.mxu0 0
        %2699 = vmatmul.mubr.bf16.gmra.mrb[0].mxu0 %v2638
        %v2700 = vpop.f32.mrb[0].mxu0
        %v2701 = vadd.f32 0.0, %v2700
        %v2702 = vpop.f32.mrb[0].mxu0
        %v2703 = vpop.f32.mrb[0].mxu0
        %v2704 = vadd.f32 0.0, %v2703
        %v2705 = vpop.f32.mrb[0].mxu0
        %2706 = vmatprep.mubr.bf16.mxu0 0
        %2707 = vmatmul.mubr.bf16.gmra.mrb[0].mxu0 %v2641
        %v2708 = vpop.f32.mrb[0].mxu0
        %v2709 = vadd.f32 0.0, %v2708
        %v2710 = vpop.f32.mrb[0].mxu0
        %v2711 = vpop.f32.mrb[0].mxu0
        %v2712 = vadd.f32 0.0, %v2711
        %v2713 = vpop.f32.mrb[0].mxu0
        %2714 = vmatprep.mubr.bf16.mxu0 0
        %2715 = vmatmul.mubr.bf16.gmra.mrb[0].mxu0 %v2644
        %v2716 = vpop.f32.mrb[0].mxu0
        %v2717 = vadd.f32 0.0, %v2716
        %v2718 = vpop.f32.mrb[0].mxu0
        %v2719 = vpop.f32.mrb[0].mxu0
        %v2720 = vadd.f32 0.0, %v2719
        %v2721 = vpop.f32.mrb[0].mxu0
        %2722 = vmatprep.mubr.bf16.mxu0 0
        %2723 = vmatmul.mubr.bf16.gmra.mrb[0].mxu0 %v2647
        %v2724 = vpop.f32.mrb[0].mxu0
        %v2725 = vadd.f32 0.0, %v2724
        %v2726 = vpop.f32.mrb[0].mxu0
        %v2727 = vpop.f32.mrb[0].mxu0
        %v2728 = vadd.f32 0.0, %v2727
        %v2729 = vpop.f32.mrb[0].mxu0
        %2730 = vmatprep.mubr.bf16.mxu0 0
        %2731 = vmatmul.mubr.bf16.gmra.mrb[0].mxu0 %v2650
        %v2732 = vpop.f32.mrb[0].mxu0
        %v2733 = vadd.f32 0.0, %v2732
        %v2734 = vpop.f32.mrb[0].mxu0
        %v2735 = vpop.f32.mrb[0].mxu0
        %v2736 = vadd.f32 0.0, %v2735
        %v2737 = vpop.f32.mrb[0].mxu0
        %2738 = vmatprep.mubr.bf16.mxu0 0
        %2739 = vmatmul.mubr.bf16.gmra.mrb[0].mxu0 %v2653
        %v2740 = vpop.f32.mrb[0].mxu0
        %v2741 = vadd.f32 0.0, %v2740
        %v2742 = vpop.f32.mrb[0].mxu0
        %v2743 = vpop.f32.mrb[0].mxu0
        %v2744 = vadd.f32 0.0, %v2743
        %v2745 = vpop.f32.mrb[0].mxu0
        %2746 = vmatprep.mubr.bf16.mxu0 0
        %2747 = vmatmul.mubr.bf16.gmra.mrb[0].mxu0 %v2656
        %v2748 = vpop.f32.mrb[0].mxu0
        %v2749 = vadd.f32 0.0, %v2748
        %v2750 = vpop.f32.mrb[0].mxu0
        %v2751 = vpop.f32.mrb[0].mxu0
        %v2752 = vadd.f32 0.0, %v2751
        %v2753 = vpop.f32.mrb[0].mxu0
        %2754 = vdwg.mxu0
        %v2755 = vadd.f32 %v2513, %v2693
        %v2756 = vadd.f32 %v2514, %v2696
        %v2757 = vadd.f32 %v2515, %v2701
        %v2758 = vadd.f32 %v2516, %v2704
        %v2759 = vadd.f32 %v2517, %v2709
        %v2760 = vadd.f32 %v2518, %v2712
        %v2761 = vadd.f32 %v2519, %v2717
        %v2762 = vadd.f32 %v2520, %v2720
        %v2763 = vadd.f32 %v2521, %v2725
        %v2764 = vadd.f32 %v2522, %v2728
        %v2765 = vadd.f32 %v2523, %v2733
        %v2766 = vadd.f32 %v2524, %v2736
        %v2767 = vadd.f32 %v2525, %v2741
        %v2768 = vadd.f32 %v2526, %v2744
        %v2769 = vadd.f32 %v2527, %v2749
        %v2770 = vadd.f32 %v2528, %v2752
        %v2771 = vld [vmem:[#allocation7] sm:$0x1]
        %v2773 = vlaneseq
        %v2774 = vshrl.u32 %v2773, 7
        %v2775 = vsub.s32 0, %v2774
        %v2776 = vrot.slane %v2771, %v2775
        %v2778 = vadd.f32 %v2755, %v2776
        %v2779 = vadd.f32 %v2756, %v2776
        %v2780 = vadd.f32 %v2757, %v2776
        %v2781 = vadd.f32 %v2758, %v2776
        %v2782 = vadd.f32 %v2759, %v2776
        %v2783 = vadd.f32 %v2760, %v2776
        %v2784 = vadd.f32 %v2761, %v2776
        %v2785 = vadd.f32 %v2762, %v2776
        %v2786 = vadd.f32 %v2763, %v2776
        %v2787 = vadd.f32 %v2764, %v2776
        %v2788 = vadd.f32 %v2765, %v2776
        %v2789 = vadd.f32 %v2766, %v2776
        %v2790 = vadd.f32 %v2767, %v2776
        %v2791 = vadd.f32 %v2768, %v2776
        %v2792 = vadd.f32 %v2769, %v2776
        %v2793 = vadd.f32 %v2770, %v2776
        %v2794 = vmax.f32 %v2778, 0.0
        %v2795 = vmax.f32 %v2779, 0.0
        %v2796 = vmax.f32 %v2780, 0.0
        %v2797 = vmax.f32 %v2781, 0.0
        %v2798 = vmax.f32 %v2782, 0.0
        %v2799 = vmax.f32 %v2783, 0.0
        %v2800 = vmax.f32 %v2784, 0.0
        %v2801 = vmax.f32 %v2785, 0.0
        %v2802 = vmax.f32 %v2786, 0.0
        %v2803 = vmax.f32 %v2787, 0.0
        %v2804 = vmax.f32 %v2788, 0.0
        %v2805 = vmax.f32 %v2789, 0.0
        %v2806 = vmax.f32 %v2790, 0.0
        %v2807 = vmax.f32 %v2791, 0.0
        %v2808 = vmax.f32 %v2792, 0.0
        %v2809 = vmax.f32 %v2793, 0.0
        %v2810 = vpack.c.bf16 %v2795, %v2794
        %v2811 = vpack.c.bf16 %v2797, %v2796
        %v2812 = vpack.c.bf16 %v2799, %v2798
        %v2813 = vpack.c.bf16 %v2801, %v2800
        %v2814 = vpack.c.bf16 %v2803, %v2802
        %v2815 = vpack.c.bf16 %v2805, %v2804
        %v2816 = vpack.c.bf16 %v2807, %v2806
        %v2817 = vpack.c.bf16 %v2809, %v2808
        %v2818 = vld [vmem:[#allocation8] sm:$0xf]
        %v2819 = vld [vmem:[#allocation8 + $0x4] sm:$0xf]
        %v2820 = vld [vmem:[#allocation8 + $0x8] sm:$0xf]
        %v2821 = vld [vmem:[#allocation8 + $0xc] sm:$0xf]
        %v2822 = vld [vmem:[#allocation8 + $0x10] sm:$0xf]
        %v2823 = vld [vmem:[#allocation8 + $0x14] sm:$0xf]
        %v2824 = vld [vmem:[#allocation8 + $0x18] sm:$0xf]
        %v2825 = vld [vmem:[#allocation8 + $0x1c] sm:$0xf]
        %v2834 = vunpack.c.l.b16 %v2818
        %v2835 = vunpack.c.l.b16 %v2819
        %v2836 = vunpack.c.l.b16 %v2820
        %v2837 = vunpack.c.l.b16 %v2821
        %v2838 = vunpack.c.l.b16 %v2822
        %v2839 = vunpack.c.l.b16 %v2823
        %v2840 = vunpack.c.l.b16 %v2824
        %v2841 = vunpack.c.l.b16 %v2825
        %v2842 = vpack.c.b16 %v2835, %v2834
        %v2843 = vpack.c.b16 %v2837, %v2836
        %v2844 = vpack.c.b16 %v2839, %v2838
        %v2845 = vpack.c.b16 %v2841, %v2840
        %vm2850 = vcmask 523264
        %v2852 = vsel %vm2850, %v2810, 0
        %v2855 = vsel %vm2850, %v2811, 0
        %v2858 = vsel %vm2850, %v2812, 0
        %v2861 = vsel %vm2850, %v2813, 0
        %v2864 = vsel %vm2850, %v2814, 0
        %v2867 = vsel %vm2850, %v2815, 0
        %v2870 = vsel %vm2850, %v2816, 0
        %v2873 = vsel %vm2850, %v2817, 0
        %2875 = vmatprep.subr.bf16.mxu0 0
        %2876 = vmatpush1.bf16.msra.mxu0 %v2842
        %2877 = vmatprep.subr.bf16.mxu0 0
        %2878 = vmatpush1.bf16.msra.mxu0 %v2843
        %2879 = vmatprep.subr.bf16.mxu0 0
        %2880 = vmatpush1.bf16.msra.mxu0 %v2844
        %2881 = vmatprep.subr.bf16.mxu0 0
        %2882 = vmatpush1.bf16.msra.mxu0 %v2845
        %2883 = vmatprep.subr.bf16.mxu0 0
        %2884 = vmatpush1.bf16.msra.mxu0 0
        %2885 = vmatprep.subr.bf16.mxu0 0
        %2886 = vmatpush1.bf16.msra.mxu0 0
        %2887 = vmatprep.subr.bf16.mxu0 0
        %2888 = vmatpush1.bf16.msra.mxu0 0
        %2889 = vmatprep.subr.bf16.mxu0 0
        %2890 = vmatpush1.bf16.msra.mxu0 0
        %2891 = vmatprep.subr.bf16.mxu0 0
        %2892 = vmatpush1.bf16.msra.mxu0 0
        %2893 = vmatprep.subr.bf16.mxu0 0
        %2894 = vmatpush1.bf16.msra.mxu0 0
        %2895 = vmatprep.subr.bf16.mxu0 0
        %2896 = vmatpush1.bf16.msra.mxu0 0
        %2897 = vmatprep.subr.bf16.mxu0 0
        %2898 = vmatpush1.bf16.msra.mxu0 0
        %2899 = vmatprep.subr.bf16.mxu0 0
        %2900 = vmatpush1.bf16.msra.mxu0 0
        %2901 = vmatprep.subr.bf16.mxu0 0
        %2902 = vmatpush1.bf16.msra.mxu0 0
        %2903 = vmatprep.subr.bf16.mxu0 0
        %2904 = vmatpush1.bf16.msra.mxu0 0
        %2905 = vmatprep.subr.bf16.mxu0 0
        %2906 = vmatpush1.bf16.msra.mxu0 0
        %2907 = vmatprep.mubr.bf16.mxu0 0
        %2908 = vmatmul.mubr.bf16.gmra.mrb[0].mxu0 %v2852
        %v2909 = vpop.f32.mrb[0].mxu0
        %v2910 = vadd.f32 0.0, %v2909
        %v2911 = vpop.f32.mrb[0].mxu0
        %v2912 = vpop.f32.mrb[0].mxu0
        %v2913 = vadd.f32 0.0, %v2912
        %v2914 = vpop.f32.mrb[0].mxu0
        %2915 = vmatprep.mubr.bf16.mxu0 0
        %2916 = vmatmul.mubr.bf16.gmra.mrb[0].mxu0 %v2855
        %v2917 = vpop.f32.mrb[0].mxu0
        %v2918 = vadd.f32 0.0, %v2917
        %v2919 = vpop.f32.mrb[0].mxu0
        %v2920 = vpop.f32.mrb[0].mxu0
        %v2921 = vadd.f32 0.0, %v2920
        %v2922 = vpop.f32.mrb[0].mxu0
        %2923 = vmatprep.mubr.bf16.mxu0 0
        %2924 = vmatmul.mubr.bf16.gmra.mrb[0].mxu0 %v2858
        %v2925 = vpop.f32.mrb[0].mxu0
        %v2926 = vadd.f32 0.0, %v2925
        %v2927 = vpop.f32.mrb[0].mxu0
        %v2928 = vpop.f32.mrb[0].mxu0
        %v2929 = vadd.f32 0.0, %v2928
        %v2930 = vpop.f32.mrb[0].mxu0
        %2931 = vmatprep.mubr.bf16.mxu0 0
        %2932 = vmatmul.mubr.bf16.gmra.mrb[0].mxu0 %v2861
        %v2933 = vpop.f32.mrb[0].mxu0
        %v2934 = vadd.f32 0.0, %v2933
        %v2935 = vpop.f32.mrb[0].mxu0
        %v2936 = vpop.f32.mrb[0].mxu0
        %v2937 = vadd.f32 0.0, %v2936
        %v2938 = vpop.f32.mrb[0].mxu0
        %2939 = vmatprep.mubr.bf16.mxu0 0
        %2940 = vmatmul.mubr.bf16.gmra.mrb[0].mxu0 %v2864
        %v2941 = vpop.f32.mrb[0].mxu0
        %v2942 = vadd.f32 0.0, %v2941
        %v2943 = vpop.f32.mrb[0].mxu0
        %v2944 = vpop.f32.mrb[0].mxu0
        %v2945 = vadd.f32 0.0, %v2944
        %v2946 = vpop.f32.mrb[0].mxu0
        %2947 = vmatprep.mubr.bf16.mxu0 0
        %2948 = vmatmul.mubr.bf16.gmra.mrb[0].mxu0 %v2867
        %v2949 = vpop.f32.mrb[0].mxu0
        %v2950 = vadd.f32 0.0, %v2949
        %v2951 = vpop.f32.mrb[0].mxu0
        %v2952 = vpop.f32.mrb[0].mxu0
        %v2953 = vadd.f32 0.0, %v2952
        %v2954 = vpop.f32.mrb[0].mxu0
        %2955 = vmatprep.mubr.bf16.mxu0 0
        %2956 = vmatmul.mubr.bf16.gmra.mrb[0].mxu0 %v2870
        %v2957 = vpop.f32.mrb[0].mxu0
        %v2958 = vadd.f32 0.0, %v2957
        %v2959 = vpop.f32.mrb[0].mxu0
        %v2960 = vpop.f32.mrb[0].mxu0
        %v2961 = vadd.f32 0.0, %v2960
        %v2962 = vpop.f32.mrb[0].mxu0
        %2963 = vmatprep.mubr.bf16.mxu0 0
        %2964 = vmatmul.mubr.bf16.gmra.mrb[0].mxu0 %v2873
        %v2965 = vpop.f32.mrb[0].mxu0
        %v2966 = vadd.f32 0.0, %v2965
        %v2967 = vpop.f32.mrb[0].mxu0
        %v2968 = vpop.f32.mrb[0].mxu0
        %v2969 = vadd.f32 0.0, %v2968
        %v2970 = vpop.f32.mrb[0].mxu0
        %2971 = vdwg.mxu0
        %vm2972 = vcmask 130048
        %2973 = vst.msk [vmem:[%s301] sm:$0xff] %vm2972, %v2910
        %2974 = vst.msk [vmem:[%s301 + $0x8] sm:$0xff] %vm2972, %v2913
        %2975 = vst.msk [vmem:[%s301 + $0x10] sm:$0xff] %vm2972, %v2918
        %2976 = vst.msk [vmem:[%s301 + $0x18] sm:$0xff] %vm2972, %v2921
        %2977 = vst.msk [vmem:[%s301 + $0x20] sm:$0xff] %vm2972, %v2926
        %2978 = vst.msk [vmem:[%s301 + $0x28] sm:$0xff] %vm2972, %v2929
        %2979 = vst.msk [vmem:[%s301 + $0x30] sm:$0xff] %vm2972, %v2934
        %2980 = vst.msk [vmem:[%s301 + $0x38] sm:$0xff] %vm2972, %v2937
        %2981 = vst.msk [vmem:[%s301 + $0x40] sm:$0xff] %vm2972, %v2942
        %2982 = vst.msk [vmem:[%s301 + $0x48] sm:$0xff] %vm2972, %v2945
        %2983 = vst.msk [vmem:[%s301 + $0x50] sm:$0xff] %vm2972, %v2950
        %2984 = vst.msk [vmem:[%s301 + $0x58] sm:$0xff] %vm2972, %v2953
        %2985 = vst.msk [vmem:[%s301 + $0x60] sm:$0xff] %vm2972, %v2958
        %2986 = vst.msk [vmem:[%s301 + $0x68] sm:$0xff] %vm2972, %v2961
        %2987 = vst.msk [vmem:[%s301 + $0x70] sm:$0xff] %vm2972, %v2966
        %2988 = vst.msk [vmem:[%s301 + $0x78] sm:$0xff] %vm2972, %v2969
        %s2989 = sand.u32 %s136, 1
        %s2990 = scalar_lea.sflag [#allocation4], %s2989
        %s2991 = sand.u32 %s136, 1
        %s2992 = smul.addr %s2991, 128
        %s2993 = scalar_lea.vmem [#allocation10], %s2992
        // Predicated region
        $region53: #{bisenet_output.1} parent=35 // pred_check
          %p2994 = pneg %p146
        $region54: #{bisenet_output.1} parent=35 // pred_check_branch
          %2996 = sbr.rel (%p2994) target = $region56
        $region55: #{bisenet_output.1} parent=35 // pred_region
          %s2997 = smul.u32 8, %s28
          %s2999 = ssub.s32 2048, 2048
          %3000 = vsyncadd %s2990, %s2999
          %s3001 = smul.addr %s2997, 2
          %s3002 = smul.addr %s27, 32
          %s3003 = sadd.s32 %s3001, %s3002
          %s3004 = smul.addr %s3003, 128
          %s3005 = scalar_lea.hbm %s4, %s3004
          %s3006 = sshll.u32 %s2993, 4
          %s3007 = int_to_ptr.vmem [resolvable:$true] %s3006
          %3012 = dma.vmem_to_hbm [thread:$0]  %s3007, 2048, %s3005, %s2990, 128, 128, 8
        $region56: #{bisenet_output.1} parent=35 // pred_fallthru
          _
      $region36: #{bisenet_output.1} parent=5 // pred_fallthru
        _
      %p3013 = scmp.le.s32.totalorder 2, %s18
      // Predicated region
      $region57: #{bisenet_output.1} parent=5 // pred_check
        %p3014 = pneg %p3013
      $region58: #{bisenet_output.1} parent=5 // pred_check_branch
        %3016 = sbr.rel (%p3014) target = $region60
      $region59: #{bisenet_output.1} parent=5 // pred_region
        %s3017 = ssub.s32 %s18, 2
        // Predicated region
        $region61: #{bisenet_output.1} parent=59 // pred_check
          %p3018 = pneg %p152
        $region62: #{bisenet_output.1} parent=59 // pred_check_branch
          %3020 = sbr.rel (%p3018) target = $region64
        $region63: #{bisenet_output.1} parent=59 // pred_region
          %s3021 = sand.u32 %s137, 1
          %s3022 = scalar_lea.sflag [#allocation4], %s3021
          %s3023 = sand.u32 %s137, 1
          %s3024 = smul.addr %s3023, 128
          %s3025 = scalar_lea.vmem [#allocation10], %s3024
          %3026 = dma.done %s3022, 2048
        $region64: #{bisenet_output.1} parent=59 // pred_fallthru
          _
      $region60: #{bisenet_output.1} parent=5 // pred_fallthru
        _
    $region6: #{bisenet_output.1} parent=1 // loop_footer
      %s22 = sadd.s32 1, %s18
    $region7: #{bisenet_output.1} parent=1 // loop_footer_branch
      %17 = sbr.rel target = $region3
    $region8: #{bisenet_output.1} parent=1 // loop_exit
      _
    %3027 = vsyncpa [#allocation3], 1
    %s3028 = scalar_lea.sflag [#allocation3], 1
    %3029 = vsyncpa %s3028, 1
    %3030 = vsyncpa [#allocation6], 1
    %3031 = vsyncpa [#allocation9], 1
    %3032 = vsyncpa [#allocation4], 1
    %s3033 = scalar_lea.sflag [#allocation4], 1
    %3034 = vsyncpa %s3033, 1

</llo_original>
